<compile_context>
chip_gen: v7x
topology: tpu7x:2x2x1
jax: 0.10.0
libtpu: 0.0.40
codegen_flags: <defaults>
</compile_context>

<pallas_src>
from functools import partial

import jax
import jax.numpy as jnp
from jax.experimental import pallas as pl
from jax.experimental.pallas import tpu as pltpu

_LANE = 128     # lane tile (last dim)
_SUBLANE = 8    # f32 sublane tile (second-to-last dim)


def _round_up(x, m):
    return (x + m - 1) // m * m


def _chunk_size(T, max_chunk):
    """Largest divisor of T that is <= max_chunk (keeps every chunk full)."""
    tc = max(1, min(T, max_chunk))
    while T % tc:
        tc -= 1
    return tc


def seq2seq_kernel(xproj_ref, dproj_ref, whh_e_ref, whh_d_ref, fc_w_ref,
                   out_ref, h_ref, c_ref):
    """Recurrent core (one time-chunk per grid step).

    xproj_ref: (Tc, B, 4*HP) bf16  encoder input proj + bias, time-major chunk
    dproj_ref: (B, 4*HP)     bf16  decoder input proj + bias
    whh_*_ref: (HP, 4*HP)    bf16  recurrent weights (gate order i,f,g,o; lane-padded)
    fc_w_ref : (1, HP)       f32   final linear weight row (bias added in wrapper)
    out_ref  : (B, 1)        f32
    h_ref/c_ref: (B, HP)     f32   carried LSTM state (VMEM scratch)
    """
    Tc, _, _ = xproj_ref.shape
    HP = whh_e_ref.shape[0]
    t_chunk = pl.program_id(0)
    last_chunk = pl.num_programs(0) - 1

    @pl.when(t_chunk == 0)
    def _():
        h_ref[...] = jnp.zeros_like(h_ref)
        c_ref[...] = jnp.zeros_like(c_ref)

    # Loop-invariant bf16 RHS loaded once -> MXU weight push hoistable across
    # the unrolled steps.
    whh_e = whh_e_ref[...]

    def cell(pre_bf16, h, c, whh):
        # bf16 MXU operands; f32 accumulate / state / nonlinearities.
        gates = pre_bf16.astype(jnp.float32) + jnp.dot(
            h.astype(jnp.bfloat16), whh, preferred_element_type=jnp.float32)
        # Lane-aligned full-tile gate slices (HP is a multiple of 128).
        i = jax.nn.sigmoid(gates[:, 0 * HP:1 * HP])
        f = jax.nn.sigmoid(gates[:, 1 * HP:2 * HP])
        g = jnp.tanh(gates[:, 2 * HP:3 * HP])
        o = jax.nn.sigmoid(gates[:, 3 * HP:4 * HP])
        c_new = f * c + i * g
        h_new = o * jnp.tanh(c_new)
        return h_new, c_new

    h = h_ref[...]
    c = c_ref[...]
    # Chunk is fully unrolled (Tc static) -> static leading-axis loads,
    # cross-step scheduler visibility.
    for j in range(Tc):
        h, c = cell(xproj_ref[j], h, c, whh_e)
    h_ref[...] = h
    c_ref[...] = c

    @pl.when(t_chunk == last_chunk)
    def _():
        # Decoder single step (PyTorch: fut.unsqueeze(1), i.e. seq_len == 1).
        hd, _ = cell(dproj_ref[...], h, c, whh_d_ref[...])
        # Final linear hidden -> 1 as VPU multiply + lane reduction (no N=1 MXU
        # matmul); padded lanes of fc_w are zero so they contribute nothing.
        out_ref[...] = jnp.sum(hd * fc_w_ref[...], axis=-1, keepdims=True)


def _pad_gate_cols(w, H, HP):
    """(in, 4H) -> (in, 4HP): pad each gate block with zero lanes up to HP."""
    if HP == H:
        return w
    blocks = [jnp.pad(w[:, k * H:(k + 1) * H], ((0, 0), (0, HP - H)))
              for k in range(4)]
    return jnp.concatenate(blocks, axis=1)


def _vmem_budget_bytes(Tc, BP, HP):
    bf16, f32 = 2, 4
    xproj_blk = Tc * BP * 4 * HP * bf16 * 2            # double-buffered chunk
    dproj = BP * 4 * HP * bf16 * 2
    weights = 2 * HP * 4 * HP * bf16 * 2
    fcw = _SUBLANE * HP * f32 * 2
    out = BP * _LANE * f32 * 2
    scratch = 2 * BP * HP * f32
    total = xproj_blk + dproj + weights + fcw + out + scratch
    # 2x headroom for compiler temporaries; keep below v7x's 64 MiB physical VMEM.
    return int(min(max(2 * total, 4 << 20), 48 << 20))


@partial(jax.jit, static_argnames=("chunk_max",))
def seq2seq_forward(past, fut, params, *, chunk_max=16):
    """past: (B, T, P) float32, fut: (B, F) float32 -> (B,) float32."""
    B, T, _ = past.shape
    H = params["whh_e"].shape[0]

    BP = _round_up(B, _SUBLANE)   # full sublane tiles (padded rows are independent)
    HP = _round_up(H, _LANE)      # each gate occupies a full lane tile

    # Lane-pad weights so every gate is a full 128-lane tile; padded gate lanes
    # see zero pre-activations and zero initial state -> padded h/c stay zero.
    wih_e = _pad_gate_cols(params["wih_e"], H, HP)                              # (P, 4HP)
    wih_d = _pad_gate_cols(params["wih_d"], H, HP)                              # (F, 4HP)
    b_e = _pad_gate_cols(params["b_e"], H, HP)                                  # (1, 4HP)
    b_d = _pad_gate_cols(params["b_d"], H, HP)                                  # (1, 4HP)
    # Recurrent weights cast to bf16 HERE (wrapper) -> half the DMA, no in-kernel cast.
    whh_e = jnp.pad(_pad_gate_cols(params["whh_e"], H, HP),
                    ((0, HP - H), (0, 0))).astype(jnp.bfloat16)                 # (HP, 4HP)
    whh_d = jnp.pad(_pad_gate_cols(params["whh_d"], H, HP),
                    ((0, HP - H), (0, 0))).astype(jnp.bfloat16)                 # (HP, 4HP)
    fc_w_row = jnp.pad(params["fc_w"], ((0, HP - H), (0, 0))).T                 # (1, HP) f32

    # Pad batch to the sublane tile.
    past_p = jnp.pad(past.astype(jnp.float32), ((0, BP - B), (0, 0), (0, 0)))
    fut_p = jnp.pad(fut.astype(jnp.float32), ((0, BP - B), (0, 0)))

    # Hoisted input projections (no recurrent dependency): one matmul each,
    # encoder projection emitted directly time-major, stored bf16 (halves the
    # largest HBM write + read and VMEM residency; accuracy already bounded by
    # the bf16 MXU operands in the recurrence).
    xproj = (jnp.einsum("btp,pg->tbg", past_p, wih_e) + b_e).astype(jnp.bfloat16)  # (T, BP, 4HP)
    dproj = (fut_p @ wih_d + b_d).astype(jnp.bfloat16)                              # (BP, 4HP)

    Tc = _chunk_size(T, chunk_max)
    n_chunks = T // Tc

    grid_spec = pltpu.PrefetchScalarGridSpec(
        num_scalar_prefetch=0,
        grid=(n_chunks,),
        in_specs=[
            pl.BlockSpec((Tc, BP, 4 * HP), lambda t: (t, 0, 0)),   # streamed xproj chunk
            pl.BlockSpec((BP, 4 * HP), lambda t: (0, 0)),          # dproj (resident)
            pl.BlockSpec((HP, 4 * HP), lambda t: (0, 0)),          # whh_e (resident)
            pl.BlockSpec((HP, 4 * HP), lambda t: (0, 0)),          # whh_d (resident)
            pl.BlockSpec((1, HP), lambda t: (0, 0)),               # fc_w row (resident)
        ],
        out_specs=pl.BlockSpec((BP, 1), lambda t: (0, 0)),
        scratch_shapes=[pltpu.VMEM((BP, HP), jnp.float32),         # h carry
                        pltpu.VMEM((BP, HP), jnp.float32)],        # c carry
    )

    out = pl.pallas_call(
        seq2seq_kernel,
        out_shape=jax.ShapeDtypeStruct((BP, 1), jnp.float32),
        grid_spec=grid_spec,
        compiler_params=pltpu.CompilerParams(
            dimension_semantics=("arbitrary",),     # time chunks carry h/c -> serial
            vmem_limit_bytes=_vmem_budget_bytes(Tc, BP, HP)),
    )(xproj, dproj, whh_e, whh_d, fc_w_row)
    # NOTE: for large batches (esp. v7x's 2 TensorCores) add a leading batch
    # grid axis with dimension_semantics=("parallel", "arbitrary") and constant
    # weight index maps; at BP=8 a single batch block is optimal.
    return out[:B, 0] + params["fc_b"][0, 0]   # add fc bias, squeeze, drop padding


def init_params(key, past_dim=2, fut_dim=5, hidden=32):
    """Deterministic synthetic init mirroring PyTorch LSTM/Linear shapes."""
    ks = jax.random.split(key, 10)
    H = hidden
    s = 1.0 / jnp.sqrt(jnp.float32(H))

    def u(k, shape):
        return jax.random.uniform(k, shape, jnp.float32, -s, s)

    # PyTorch layout: weight_ih (4H, in), weight_hh (4H, H); we store transposed.
    wih_e = u(ks[0], (4 * H, past_dim)).T   # (P, 4H)
    whh_e = u(ks[1], (4 * H, H)).T          # (H, 4H)
    b_e = (u(ks[2], (4 * H,)) + u(ks[3], (4 * H,)))[None, :]  # b_ih + b_hh -> (1, 4H)

    wih_d = u(ks[4], (4 * H, fut_dim)).T    # (F, 4H)
    whh_d = u(ks[5], (4 * H, H)).T          # (H, 4H)
    b_d = (u(ks[6], (4 * H,)) + u(ks[7], (4 * H,)))[None, :]

    fc_w = u(ks[8], (1, H)).T               # (H, 1)
    fc_b = u(ks[9], (1,))[None, :]          # (1, 1)

    return dict(wih_e=wih_e, whh_e=whh_e, b_e=b_e,
                wih_d=wih_d, whh_d=whh_d, b_d=b_d,
                fc_w=fc_w, fc_b=fc_b)


def seq2seq_reference(past, fut, params):
    """Pure-JAX f32 reference matching PyTorch nn.LSTM semantics (gate order i,f,g,o)."""
    B, T, _ = past.shape
    H = params["whh_e"].shape[0]

    def step(x, h, c, wih, whh, b):
        gates = x @ wih + h @ whh + b
        i = jax.nn.sigmoid(gates[:, 0 * H:1 * H])
        f = jax.nn.sigmoid(gates[:, 1 * H:2 * H])
        g = jnp.tanh(gates[:, 2 * H:3 * H])
        o = jax.nn.sigmoid(gates[:, 3 * H:4 * H])
        c = f * c + i * g
        h = o * jnp.tanh(c)
        return h, c

    h = jnp.zeros((B, H), jnp.float32)
    c = jnp.zeros((B, H), jnp.float32)
    for t in range(T):
        h, c = step(past[:, t, :], h, c, params["wih_e"], params["whh_e"], params["b_e"])
    h, _ = step(fut, h, c, params["wih_d"], params["whh_d"], params["b_d"])
    return (h @ params["fc_w"] + params["fc_b"])[:, 0]


if __name__ == "__main__":
    B, T, P, F, H = 2, 8, 2, 5, 32

    key = jax.random.PRNGKey(0)
    k_past, k_fut, k_params = jax.random.split(key, 3)

    past = jax.random.normal(k_past, (B, T, P), jnp.float32)
    fut = jax.random.normal(k_fut, (B, F), jnp.float32)
    params = init_params(k_params, past_dim=P, fut_dim=F, hidden=H)

    ref = seq2seq_reference(past, fut, params)

    # Single-chunk path (T=8 fits one chunk).
    out = jax.block_until_ready(seq2seq_forward(past, fut, params))
    assert out.shape == (B,)
    # bf16 MXU operands / bf16 xproj in the recurrence (f32 accumulate/state)
    # -> loosened tolerance.
    assert jnp.allclose(out, ref, atol=3e-2, rtol=3e-2), (out, ref)

    # Multi-chunk path (4 grid steps of Tc=2) exercises the h/c VMEM carry.
    out_chunked = jax.block_until_ready(seq2seq_forward(past, fut, params, chunk_max=2))
    assert jnp.allclose(out_chunked, ref, atol=3e-2, rtol=3e-2), (out_chunked, ref)

    print("KERNEL_OK")
</pallas_src>

<mosaic_0001>
module attributes {stable_mosaic.version = 11 : i64} {
  func.func @seq2seq_kernel(%arg0: i32, %arg1: memref<8x8x512xbf16, #tpu.memory_space<vmem>>, %arg2: memref<8x512xbf16, #tpu.memory_space<vmem>>, %arg3: memref<128x512xbf16, #tpu.memory_space<vmem>>, %arg4: memref<128x512xbf16, #tpu.memory_space<vmem>>, %arg5: memref<1x128xf32, #tpu.memory_space<vmem>>, %arg6: memref<8x1xf32, #tpu.memory_space<vmem>>, %arg7: memref<8x128xf32, #tpu.memory_space<vmem>>, %arg8: memref<8x128xf32, #tpu.memory_space<vmem>>) attributes {dimension_semantics = [#tpu.dimension_semantics<arbitrary>], iteration_bounds = array<i64: 1>, scalar_prefetch = 0 : i64, scratch_operands = 2 : i64, tpu.core_type = #tpu.core_type<tc>, window_params = [{transform_indices = @transform_0, window_bounds = array<i64: 8, 8, 512>}, {pipeline_mode = #tpu.pipeline_mode<synchronous>, transform_indices = @transform_1, window_bounds = array<i64: 8, 512>}, {pipeline_mode = #tpu.pipeline_mode<synchronous>, transform_indices = @transform_2, window_bounds = array<i64: 128, 512>}, {pipeline_mode = #tpu.pipeline_mode<synchronous>, transform_indices = @transform_3, window_bounds = array<i64: 128, 512>}, {pipeline_mode = #tpu.pipeline_mode<synchronous>, transform_indices = @transform_4, window_bounds = array<i64: 1, 128>}, {pipeline_mode = #tpu.pipeline_mode<synchronous>, transform_indices = @transform_5, window_bounds = array<i64: 8, 1>}]} {
    %c0_i32 = arith.constant 0 : i32
    %0 = arith.cmpi eq, %arg0, %c0_i32 : i32
    %1 = arith.extui %0 : i1 to i32
    %c0_i32_0 = arith.constant 0 : i32
    %2 = arith.cmpi ne, %1, %c0_i32_0 : i32
    scf.if %2 {
      %cst_60 = arith.constant 0.000000e+00 : f32
      %259 = vector.broadcast %cst_60 : f32 to vector<8x128xf32>
      %c0_61 = arith.constant 0 : index
      %c0_62 = arith.constant 0 : index
      %260 = vector.load %arg7[%c0_61, %c0_62] : memref<8x128xf32, #tpu.memory_space<vmem>>, vector<8x128xf32>
      tpu.vector_store %arg7[%c0_61, %c0_62], %259 {strides = array<i32>} : memref<8x128xf32, #tpu.memory_space<vmem>>, vector<8x128xf32>,
      %cst_63 = arith.constant 0.000000e+00 : f32
      %261 = vector.broadcast %cst_63 : f32 to vector<8x128xf32>
      %c0_64 = arith.constant 0 : index
      %c0_65 = arith.constant 0 : index
      %262 = vector.load %arg8[%c0_64, %c0_65] : memref<8x128xf32, #tpu.memory_space<vmem>>, vector<8x128xf32>
      tpu.vector_store %arg8[%c0_64, %c0_65], %261 {strides = array<i32>} : memref<8x128xf32, #tpu.memory_space<vmem>>, vector<8x128xf32>,
    } else {
    }
    %c0 = arith.constant 0 : index
    %c0_1 = arith.constant 0 : index
    %3 = vector.load %arg3[%c0, %c0_1] : memref<128x512xbf16, #tpu.memory_space<vmem>>, vector<128x512xbf16>
    %c0_2 = arith.constant 0 : index
    %c0_3 = arith.constant 0 : index
    %4 = vector.load %arg7[%c0_2, %c0_3] : memref<8x128xf32, #tpu.memory_space<vmem>>, vector<8x128xf32>
    %c0_4 = arith.constant 0 : index
    %c0_5 = arith.constant 0 : index
    %5 = vector.load %arg8[%c0_4, %c0_5] : memref<8x128xf32, #tpu.memory_space<vmem>>, vector<8x128xf32>
    %c0_6 = arith.constant 0 : index
    %c0_7 = arith.constant 0 : index
    %c0_8 = arith.constant 0 : index
    %6 = vector.load %arg1[%c0_6, %c0_7, %c0_8] : memref<8x8x512xbf16, #tpu.memory_space<vmem>>, vector<1x8x512xbf16>
    %7 = vector.shape_cast %6 : vector<1x8x512xbf16> to vector<8x512xbf16>
    %8 = arith.extf %7 : vector<8x512xbf16> to vector<8x512xf32>
    %9 = arith.truncf %4 : vector<8x128xf32> to vector<8x128xbf16>
    %cst = arith.constant dense<0.000000e+00> : vector<8x512xf32>
    %10 = tpu.matmul %9, %3, %cst {dimension_numbers = #tpu.dot_dimension_numbers<[1], [0], [0], [1], [0, 0, 1, 1], [], []>} : vector<8x128xbf16>, vector<128x512xbf16>, vector<8x512xf32> -> vector<8x512xf32>
    %11 = arith.addf %8, %10 : vector<8x512xf32>
    %12 = vector.extract_strided_slice %11 {offsets = [0, 0], sizes = [8, 128], strides = [1, 1]} : vector<8x512xf32> to vector<8x128xf32>
    %13 = arith.negf %12 : vector<8x128xf32>
    %14 = math.exp %13 : vector<8x128xf32>
    %cst_9 = arith.constant 1.000000e+00 : f32
    %15 = vector.broadcast %cst_9 : f32 to vector<8x128xf32>
    %16 = arith.addf %15, %14 : vector<8x128xf32>
    %17 = arith.divf %15, %16 : vector<8x128xf32>
    %18 = vector.extract_strided_slice %11 {offsets = [0, 128], sizes = [8, 128], strides = [1, 1]} : vector<8x512xf32> to vector<8x128xf32>
    %19 = arith.negf %18 : vector<8x128xf32>
    %20 = math.exp %19 : vector<8x128xf32>
    %cst_10 = arith.constant 1.000000e+00 : f32
    %21 = vector.broadcast %cst_10 : f32 to vector<8x128xf32>
    %22 = arith.addf %21, %20 : vector<8x128xf32>
    %23 = arith.divf %21, %22 : vector<8x128xf32>
    %24 = vector.extract_strided_slice %11 {offsets = [0, 256], sizes = [8, 128], strides = [1, 1]} : vector<8x512xf32> to vector<8x128xf32>
    %25 = math.tanh %24 : vector<8x128xf32>
    %26 = vector.extract_strided_slice %11 {offsets = [0, 384], sizes = [8, 128], strides = [1, 1]} : vector<8x512xf32> to vector<8x128xf32>
    %27 = arith.negf %26 : vector<8x128xf32>
    %28 = math.exp %27 : vector<8x128xf32>
    %cst_11 = arith.constant 1.000000e+00 : f32
    %29 = vector.broadcast %cst_11 : f32 to vector<8x128xf32>
    %30 = arith.addf %29, %28 : vector<8x128xf32>
    %31 = arith.divf %29, %30 : vector<8x128xf32>
    %32 = arith.mulf %23, %5 : vector<8x128xf32>
    %33 = arith.mulf %17, %25 : vector<8x128xf32>
    %34 = arith.addf %32, %33 : vector<8x128xf32>
    %35 = math.tanh %34 : vector<8x128xf32>
    %36 = arith.mulf %31, %35 : vector<8x128xf32>
    %c1 = arith.constant 1 : index
    %c0_12 = arith.constant 0 : index
    %c0_13 = arith.constant 0 : index
    %37 = vector.load %arg1[%c1, %c0_12, %c0_13] : memref<8x8x512xbf16, #tpu.memory_space<vmem>>, vector<1x8x512xbf16>
    %38 = vector.shape_cast %37 : vector<1x8x512xbf16> to vector<8x512xbf16>
    %39 = arith.extf %38 : vector<8x512xbf16> to vector<8x512xf32>
    %40 = arith.truncf %36 : vector<8x128xf32> to vector<8x128xbf16>
    %cst_14 = arith.constant dense<0.000000e+00> : vector<8x512xf32>
    %41 = tpu.matmul %40, %3, %cst_14 {dimension_numbers = #tpu.dot_dimension_numbers<[1], [0], [0], [1], [0, 0, 1, 1], [], []>} : vector<8x128xbf16>, vector<128x512xbf16>, vector<8x512xf32> -> vector<8x512xf32>
    %42 = arith.addf %39, %41 : vector<8x512xf32>
    %43 = vector.extract_strided_slice %42 {offsets = [0, 0], sizes = [8, 128], strides = [1, 1]} : vector<8x512xf32> to vector<8x128xf32>
    %44 = arith.negf %43 : vector<8x128xf32>
    %45 = math.exp %44 : vector<8x128xf32>
    %cst_15 = arith.constant 1.000000e+00 : f32
    %46 = vector.broadcast %cst_15 : f32 to vector<8x128xf32>
    %47 = arith.addf %46, %45 : vector<8x128xf32>
    %48 = arith.divf %46, %47 : vector<8x128xf32>
    %49 = vector.extract_strided_slice %42 {offsets = [0, 128], sizes = [8, 128], strides = [1, 1]} : vector<8x512xf32> to vector<8x128xf32>
    %50 = arith.negf %49 : vector<8x128xf32>
    %51 = math.exp %50 : vector<8x128xf32>
    %cst_16 = arith.constant 1.000000e+00 : f32
    %52 = vector.broadcast %cst_16 : f32 to vector<8x128xf32>
    %53 = arith.addf %52, %51 : vector<8x128xf32>
    %54 = arith.divf %52, %53 : vector<8x128xf32>
    %55 = vector.extract_strided_slice %42 {offsets = [0, 256], sizes = [8, 128], strides = [1, 1]} : vector<8x512xf32> to vector<8x128xf32>
    %56 = math.tanh %55 : vector<8x128xf32>
    %57 = vector.extract_strided_slice %42 {offsets = [0, 384], sizes = [8, 128], strides = [1, 1]} : vector<8x512xf32> to vector<8x128xf32>
    %58 = arith.negf %57 : vector<8x128xf32>
    %59 = math.exp %58 : vector<8x128xf32>
    %cst_17 = arith.constant 1.000000e+00 : f32
    %60 = vector.broadcast %cst_17 : f32 to vector<8x128xf32>
    %61 = arith.addf %60, %59 : vector<8x128xf32>
    %62 = arith.divf %60, %61 : vector<8x128xf32>
    %63 = arith.mulf %54, %34 : vector<8x128xf32>
    %64 = arith.mulf %48, %56 : vector<8x128xf32>
    %65 = arith.addf %63, %64 : vector<8x128xf32>
    %66 = math.tanh %65 : vector<8x128xf32>
    %67 = arith.mulf %62, %66 : vector<8x128xf32>
    %c2 = arith.constant 2 : index
    %c0_18 = arith.constant 0 : index
    %c0_19 = arith.constant 0 : index
    %68 = vector.load %arg1[%c2, %c0_18, %c0_19] : memref<8x8x512xbf16, #tpu.memory_space<vmem>>, vector<1x8x512xbf16>
    %69 = vector.shape_cast %68 : vector<1x8x512xbf16> to vector<8x512xbf16>
    %70 = arith.extf %69 : vector<8x512xbf16> to vector<8x512xf32>
    %71 = arith.truncf %67 : vector<8x128xf32> to vector<8x128xbf16>
    %cst_20 = arith.constant dense<0.000000e+00> : vector<8x512xf32>
    %72 = tpu.matmul %71, %3, %cst_20 {dimension_numbers = #tpu.dot_dimension_numbers<[1], [0], [0], [1], [0, 0, 1, 1], [], []>} : vector<8x128xbf16>, vector<128x512xbf16>, vector<8x512xf32> -> vector<8x512xf32>
    %73 = arith.addf %70, %72 : vector<8x512xf32>
    %74 = vector.extract_strided_slice %73 {offsets = [0, 0], sizes = [8, 128], strides = [1, 1]} : vector<8x512xf32> to vector<8x128xf32>
    %75 = arith.negf %74 : vector<8x128xf32>
    %76 = math.exp %75 : vector<8x128xf32>
    %cst_21 = arith.constant 1.000000e+00 : f32
    %77 = vector.broadcast %cst_21 : f32 to vector<8x128xf32>
    %78 = arith.addf %77, %76 : vector<8x128xf32>
    %79 = arith.divf %77, %78 : vector<8x128xf32>
    %80 = vector.extract_strided_slice %73 {offsets = [0, 128], sizes = [8, 128], strides = [1, 1]} : vector<8x512xf32> to vector<8x128xf32>
    %81 = arith.negf %80 : vector<8x128xf32>
    %82 = math.exp %81 : vector<8x128xf32>
    %cst_22 = arith.constant 1.000000e+00 : f32
    %83 = vector.broadcast %cst_22 : f32 to vector<8x128xf32>
    %84 = arith.addf %83, %82 : vector<8x128xf32>
    %85 = arith.divf %83, %84 : vector<8x128xf32>
    %86 = vector.extract_strided_slice %73 {offsets = [0, 256], sizes = [8, 128], strides = [1, 1]} : vector<8x512xf32> to vector<8x128xf32>
    %87 = math.tanh %86 : vector<8x128xf32>
    %88 = vector.extract_strided_slice %73 {offsets = [0, 384], sizes = [8, 128], strides = [1, 1]} : vector<8x512xf32> to vector<8x128xf32>
    %89 = arith.negf %88 : vector<8x128xf32>
    %90 = math.exp %89 : vector<8x128xf32>
    %cst_23 = arith.constant 1.000000e+00 : f32
    %91 = vector.broadcast %cst_23 : f32 to vector<8x128xf32>
    %92 = arith.addf %91, %90 : vector<8x128xf32>
    %93 = arith.divf %91, %92 : vector<8x128xf32>
    %94 = arith.mulf %85, %65 : vector<8x128xf32>
    %95 = arith.mulf %79, %87 : vector<8x128xf32>
    %96 = arith.addf %94, %95 : vector<8x128xf32>
    %97 = math.tanh %96 : vector<8x128xf32>
    %98 = arith.mulf %93, %97 : vector<8x128xf32>
    %c3 = arith.constant 3 : index
    %c0_24 = arith.constant 0 : index
    %c0_25 = arith.constant 0 : index
    %99 = vector.load %arg1[%c3, %c0_24, %c0_25] : memref<8x8x512xbf16, #tpu.memory_space<vmem>>, vector<1x8x512xbf16>
    %100 = vector.shape_cast %99 : vector<1x8x512xbf16> to vector<8x512xbf16>
    %101 = arith.extf %100 : vector<8x512xbf16> to vector<8x512xf32>
    %102 = arith.truncf %98 : vector<8x128xf32> to vector<8x128xbf16>
    %cst_26 = arith.constant dense<0.000000e+00> : vector<8x512xf32>
    %103 = tpu.matmul %102, %3, %cst_26 {dimension_numbers = #tpu.dot_dimension_numbers<[1], [0], [0], [1], [0, 0, 1, 1], [], []>} : vector<8x128xbf16>, vector<128x512xbf16>, vector<8x512xf32> -> vector<8x512xf32>
    %104 = arith.addf %101, %103 : vector<8x512xf32>
    %105 = vector.extract_strided_slice %104 {offsets = [0, 0], sizes = [8, 128], strides = [1, 1]} : vector<8x512xf32> to vector<8x128xf32>
    %106 = arith.negf %105 : vector<8x128xf32>
    %107 = math.exp %106 : vector<8x128xf32>
    %cst_27 = arith.constant 1.000000e+00 : f32
    %108 = vector.broadcast %cst_27 : f32 to vector<8x128xf32>
    %109 = arith.addf %108, %107 : vector<8x128xf32>
    %110 = arith.divf %108, %109 : vector<8x128xf32>
    %111 = vector.extract_strided_slice %104 {offsets = [0, 128], sizes = [8, 128], strides = [1, 1]} : vector<8x512xf32> to vector<8x128xf32>
    %112 = arith.negf %111 : vector<8x128xf32>
    %113 = math.exp %112 : vector<8x128xf32>
    %cst_28 = arith.constant 1.000000e+00 : f32
    %114 = vector.broadcast %cst_28 : f32 to vector<8x128xf32>
    %115 = arith.addf %114, %113 : vector<8x128xf32>
    %116 = arith.divf %114, %115 : vector<8x128xf32>
    %117 = vector.extract_strided_slice %104 {offsets = [0, 256], sizes = [8, 128], strides = [1, 1]} : vector<8x512xf32> to vector<8x128xf32>
    %118 = math.tanh %117 : vector<8x128xf32>
    %119 = vector.extract_strided_slice %104 {offsets = [0, 384], sizes = [8, 128], strides = [1, 1]} : vector<8x512xf32> to vector<8x128xf32>
    %120 = arith.negf %119 : vector<8x128xf32>
    %121 = math.exp %120 : vector<8x128xf32>
    %cst_29 = arith.constant 1.000000e+00 : f32
    %122 = vector.broadcast %cst_29 : f32 to vector<8x128xf32>
    %123 = arith.addf %122, %121 : vector<8x128xf32>
    %124 = arith.divf %122, %123 : vector<8x128xf32>
    %125 = arith.mulf %116, %96 : vector<8x128xf32>
    %126 = arith.mulf %110, %118 : vector<8x128xf32>
    %127 = arith.addf %125, %126 : vector<8x128xf32>
    %128 = math.tanh %127 : vector<8x128xf32>
    %129 = arith.mulf %124, %128 : vector<8x128xf32>
    %c4 = arith.constant 4 : index
    %c0_30 = arith.constant 0 : index
    %c0_31 = arith.constant 0 : index
    %130 = vector.load %arg1[%c4, %c0_30, %c0_31] : memref<8x8x512xbf16, #tpu.memory_space<vmem>>, vector<1x8x512xbf16>
    %131 = vector.shape_cast %130 : vector<1x8x512xbf16> to vector<8x512xbf16>
    %132 = arith.extf %131 : vector<8x512xbf16> to vector<8x512xf32>
    %133 = arith.truncf %129 : vector<8x128xf32> to vector<8x128xbf16>
    %cst_32 = arith.constant dense<0.000000e+00> : vector<8x512xf32>
    %134 = tpu.matmul %133, %3, %cst_32 {dimension_numbers = #tpu.dot_dimension_numbers<[1], [0], [0], [1], [0, 0, 1, 1], [], []>} : vector<8x128xbf16>, vector<128x512xbf16>, vector<8x512xf32> -> vector<8x512xf32>
    %135 = arith.addf %132, %134 : vector<8x512xf32>
    %136 = vector.extract_strided_slice %135 {offsets = [0, 0], sizes = [8, 128], strides = [1, 1]} : vector<8x512xf32> to vector<8x128xf32>
    %137 = arith.negf %136 : vector<8x128xf32>
    %138 = math.exp %137 : vector<8x128xf32>
    %cst_33 = arith.constant 1.000000e+00 : f32
    %139 = vector.broadcast %cst_33 : f32 to vector<8x128xf32>
    %140 = arith.addf %139, %138 : vector<8x128xf32>
    %141 = arith.divf %139, %140 : vector<8x128xf32>
    %142 = vector.extract_strided_slice %135 {offsets = [0, 128], sizes = [8, 128], strides = [1, 1]} : vector<8x512xf32> to vector<8x128xf32>
    %143 = arith.negf %142 : vector<8x128xf32>
    %144 = math.exp %143 : vector<8x128xf32>
    %cst_34 = arith.constant 1.000000e+00 : f32
    %145 = vector.broadcast %cst_34 : f32 to vector<8x128xf32>
    %146 = arith.addf %145, %144 : vector<8x128xf32>
    %147 = arith.divf %145, %146 : vector<8x128xf32>
    %148 = vector.extract_strided_slice %135 {offsets = [0, 256], sizes = [8, 128], strides = [1, 1]} : vector<8x512xf32> to vector<8x128xf32>
    %149 = math.tanh %148 : vector<8x128xf32>
    %150 = vector.extract_strided_slice %135 {offsets = [0, 384], sizes = [8, 128], strides = [1, 1]} : vector<8x512xf32> to vector<8x128xf32>
    %151 = arith.negf %150 : vector<8x128xf32>
    %152 = math.exp %151 : vector<8x128xf32>
    %cst_35 = arith.constant 1.000000e+00 : f32
    %153 = vector.broadcast %cst_35 : f32 to vector<8x128xf32>
    %154 = arith.addf %153, %152 : vector<8x128xf32>
    %155 = arith.divf %153, %154 : vector<8x128xf32>
    %156 = arith.mulf %147, %127 : vector<8x128xf32>
    %157 = arith.mulf %141, %149 : vector<8x128xf32>
    %158 = arith.addf %156, %157 : vector<8x128xf32>
    %159 = math.tanh %158 : vector<8x128xf32>
    %160 = arith.mulf %155, %159 : vector<8x128xf32>
    %c5 = arith.constant 5 : index
    %c0_36 = arith.constant 0 : index
    %c0_37 = arith.constant 0 : index
    %161 = vector.load %arg1[%c5, %c0_36, %c0_37] : memref<8x8x512xbf16, #tpu.memory_space<vmem>>, vector<1x8x512xbf16>
    %162 = vector.shape_cast %161 : vector<1x8x512xbf16> to vector<8x512xbf16>
    %163 = arith.extf %162 : vector<8x512xbf16> to vector<8x512xf32>
    %164 = arith.truncf %160 : vector<8x128xf32> to vector<8x128xbf16>
    %cst_38 = arith.constant dense<0.000000e+00> : vector<8x512xf32>
    %165 = tpu.matmul %164, %3, %cst_38 {dimension_numbers = #tpu.dot_dimension_numbers<[1], [0], [0], [1], [0, 0, 1, 1], [], []>} : vector<8x128xbf16>, vector<128x512xbf16>, vector<8x512xf32> -> vector<8x512xf32>
    %166 = arith.addf %163, %165 : vector<8x512xf32>
    %167 = vector.extract_strided_slice %166 {offsets = [0, 0], sizes = [8, 128], strides = [1, 1]} : vector<8x512xf32> to vector<8x128xf32>
    %168 = arith.negf %167 : vector<8x128xf32>
    %169 = math.exp %168 : vector<8x128xf32>
    %cst_39 = arith.constant 1.000000e+00 : f32
    %170 = vector.broadcast %cst_39 : f32 to vector<8x128xf32>
    %171 = arith.addf %170, %169 : vector<8x128xf32>
    %172 = arith.divf %170, %171 : vector<8x128xf32>
    %173 = vector.extract_strided_slice %166 {offsets = [0, 128], sizes = [8, 128], strides = [1, 1]} : vector<8x512xf32> to vector<8x128xf32>
    %174 = arith.negf %173 : vector<8x128xf32>
    %175 = math.exp %174 : vector<8x128xf32>
    %cst_40 = arith.constant 1.000000e+00 : f32
    %176 = vector.broadcast %cst_40 : f32 to vector<8x128xf32>
    %177 = arith.addf %176, %175 : vector<8x128xf32>
    %178 = arith.divf %176, %177 : vector<8x128xf32>
    %179 = vector.extract_strided_slice %166 {offsets = [0, 256], sizes = [8, 128], strides = [1, 1]} : vector<8x512xf32> to vector<8x128xf32>
    %180 = math.tanh %179 : vector<8x128xf32>
    %181 = vector.extract_strided_slice %166 {offsets = [0, 384], sizes = [8, 128], strides = [1, 1]} : vector<8x512xf32> to vector<8x128xf32>
    %182 = arith.negf %181 : vector<8x128xf32>
    %183 = math.exp %182 : vector<8x128xf32>
    %cst_41 = arith.constant 1.000000e+00 : f32
    %184 = vector.broadcast %cst_41 : f32 to vector<8x128xf32>
    %185 = arith.addf %184, %183 : vector<8x128xf32>
    %186 = arith.divf %184, %185 : vector<8x128xf32>
    %187 = arith.mulf %178, %158 : vector<8x128xf32>
    %188 = arith.mulf %172, %180 : vector<8x128xf32>
    %189 = arith.addf %187, %188 : vector<8x128xf32>
    %190 = math.tanh %189 : vector<8x128xf32>
    %191 = arith.mulf %186, %190 : vector<8x128xf32>
    %c6 = arith.constant 6 : index
    %c0_42 = arith.constant 0 : index
    %c0_43 = arith.constant 0 : index
    %192 = vector.load %arg1[%c6, %c0_42, %c0_43] : memref<8x8x512xbf16, #tpu.memory_space<vmem>>, vector<1x8x512xbf16>
    %193 = vector.shape_cast %192 : vector<1x8x512xbf16> to vector<8x512xbf16>
    %194 = arith.extf %193 : vector<8x512xbf16> to vector<8x512xf32>
    %195 = arith.truncf %191 : vector<8x128xf32> to vector<8x128xbf16>
    %cst_44 = arith.constant dense<0.000000e+00> : vector<8x512xf32>
    %196 = tpu.matmul %195, %3, %cst_44 {dimension_numbers = #tpu.dot_dimension_numbers<[1], [0], [0], [1], [0, 0, 1, 1], [], []>} : vector<8x128xbf16>, vector<128x512xbf16>, vector<8x512xf32> -> vector<8x512xf32>
    %197 = arith.addf %194, %196 : vector<8x512xf32>
    %198 = vector.extract_strided_slice %197 {offsets = [0, 0], sizes = [8, 128], strides = [1, 1]} : vector<8x512xf32> to vector<8x128xf32>
    %199 = arith.negf %198 : vector<8x128xf32>
    %200 = math.exp %199 : vector<8x128xf32>
    %cst_45 = arith.constant 1.000000e+00 : f32
    %201 = vector.broadcast %cst_45 : f32 to vector<8x128xf32>
    %202 = arith.addf %201, %200 : vector<8x128xf32>
    %203 = arith.divf %201, %202 : vector<8x128xf32>
    %204 = vector.extract_strided_slice %197 {offsets = [0, 128], sizes = [8, 128], strides = [1, 1]} : vector<8x512xf32> to vector<8x128xf32>
    %205 = arith.negf %204 : vector<8x128xf32>
    %206 = math.exp %205 : vector<8x128xf32>
    %cst_46 = arith.constant 1.000000e+00 : f32
    %207 = vector.broadcast %cst_46 : f32 to vector<8x128xf32>
    %208 = arith.addf %207, %206 : vector<8x128xf32>
    %209 = arith.divf %207, %208 : vector<8x128xf32>
    %210 = vector.extract_strided_slice %197 {offsets = [0, 256], sizes = [8, 128], strides = [1, 1]} : vector<8x512xf32> to vector<8x128xf32>
    %211 = math.tanh %210 : vector<8x128xf32>
    %212 = vector.extract_strided_slice %197 {offsets = [0, 384], sizes = [8, 128], strides = [1, 1]} : vector<8x512xf32> to vector<8x128xf32>
    %213 = arith.negf %212 : vector<8x128xf32>
    %214 = math.exp %213 : vector<8x128xf32>
    %cst_47 = arith.constant 1.000000e+00 : f32
    %215 = vector.broadcast %cst_47 : f32 to vector<8x128xf32>
    %216 = arith.addf %215, %214 : vector<8x128xf32>
    %217 = arith.divf %215, %216 : vector<8x128xf32>
    %218 = arith.mulf %209, %189 : vector<8x128xf32>
    %219 = arith.mulf %203, %211 : vector<8x128xf32>
    %220 = arith.addf %218, %219 : vector<8x128xf32>
    %221 = math.tanh %220 : vector<8x128xf32>
    %222 = arith.mulf %217, %221 : vector<8x128xf32>
    %c7 = arith.constant 7 : index
    %c0_48 = arith.constant 0 : index
    %c0_49 = arith.constant 0 : index
    %223 = vector.load %arg1[%c7, %c0_48, %c0_49] : memref<8x8x512xbf16, #tpu.memory_space<vmem>>, vector<1x8x512xbf16>
    %224 = vector.shape_cast %223 : vector<1x8x512xbf16> to vector<8x512xbf16>
    %225 = arith.extf %224 : vector<8x512xbf16> to vector<8x512xf32>
    %226 = arith.truncf %222 : vector<8x128xf32> to vector<8x128xbf16>
    %cst_50 = arith.constant dense<0.000000e+00> : vector<8x512xf32>
    %227 = tpu.matmul %226, %3, %cst_50 {dimension_numbers = #tpu.dot_dimension_numbers<[1], [0], [0], [1], [0, 0, 1, 1], [], []>} : vector<8x128xbf16>, vector<128x512xbf16>, vector<8x512xf32> -> vector<8x512xf32>
    %228 = arith.addf %225, %227 : vector<8x512xf32>
    %229 = vector.extract_strided_slice %228 {offsets = [0, 0], sizes = [8, 128], strides = [1, 1]} : vector<8x512xf32> to vector<8x128xf32>
    %230 = arith.negf %229 : vector<8x128xf32>
    %231 = math.exp %230 : vector<8x128xf32>
    %cst_51 = arith.constant 1.000000e+00 : f32
    %232 = vector.broadcast %cst_51 : f32 to vector<8x128xf32>
    %233 = arith.addf %232, %231 : vector<8x128xf32>
    %234 = arith.divf %232, %233 : vector<8x128xf32>
    %235 = vector.extract_strided_slice %228 {offsets = [0, 128], sizes = [8, 128], strides = [1, 1]} : vector<8x512xf32> to vector<8x128xf32>
    %236 = arith.negf %235 : vector<8x128xf32>
    %237 = math.exp %236 : vector<8x128xf32>
    %cst_52 = arith.constant 1.000000e+00 : f32
    %238 = vector.broadcast %cst_52 : f32 to vector<8x128xf32>
    %239 = arith.addf %238, %237 : vector<8x128xf32>
    %240 = arith.divf %238, %239 : vector<8x128xf32>
    %241 = vector.extract_strided_slice %228 {offsets = [0, 256], sizes = [8, 128], strides = [1, 1]} : vector<8x512xf32> to vector<8x128xf32>
    %242 = math.tanh %241 : vector<8x128xf32>
    %243 = vector.extract_strided_slice %228 {offsets = [0, 384], sizes = [8, 128], strides = [1, 1]} : vector<8x512xf32> to vector<8x128xf32>
    %244 = arith.negf %243 : vector<8x128xf32>
    %245 = math.exp %244 : vector<8x128xf32>
    %cst_53 = arith.constant 1.000000e+00 : f32
    %246 = vector.broadcast %cst_53 : f32 to vector<8x128xf32>
    %247 = arith.addf %246, %245 : vector<8x128xf32>
    %248 = arith.divf %246, %247 : vector<8x128xf32>
    %249 = arith.mulf %240, %220 : vector<8x128xf32>
    %250 = arith.mulf %234, %242 : vector<8x128xf32>
    %251 = arith.addf %249, %250 : vector<8x128xf32>
    %252 = math.tanh %251 : vector<8x128xf32>
    %253 = arith.mulf %248, %252 : vector<8x128xf32>
    %c0_54 = arith.constant 0 : index
    %c0_55 = arith.constant 0 : index
    %254 = vector.load %arg7[%c0_54, %c0_55] : memref<8x128xf32, #tpu.memory_space<vmem>>, vector<8x128xf32>
    tpu.vector_store %arg7[%c0_54, %c0_55], %253 {strides = array<i32>} : memref<8x128xf32, #tpu.memory_space<vmem>>, vector<8x128xf32>,
    %c0_56 = arith.constant 0 : index
    %c0_57 = arith.constant 0 : index
    %255 = vector.load %arg8[%c0_56, %c0_57] : memref<8x128xf32, #tpu.memory_space<vmem>>, vector<8x128xf32>
    tpu.vector_store %arg8[%c0_56, %c0_57], %251 {strides = array<i32>} : memref<8x128xf32, #tpu.memory_space<vmem>>, vector<8x128xf32>,
    %c0_i32_58 = arith.constant 0 : i32
    %256 = arith.cmpi eq, %arg0, %c0_i32_58 : i32
    %257 = arith.extui %256 : i1 to i32
    %c0_i32_59 = arith.constant 0 : i32
    %258 = arith.cmpi ne, %257, %c0_i32_59 : i32
    scf.if %258 {
      %c0_60 = arith.constant 0 : index
      %c0_61 = arith.constant 0 : index
      %259 = vector.load %arg2[%c0_60, %c0_61] : memref<8x512xbf16, #tpu.memory_space<vmem>>, vector<8x512xbf16>
      %c0_62 = arith.constant 0 : index
      %c0_63 = arith.constant 0 : index
      %260 = vector.load %arg4[%c0_62, %c0_63] : memref<128x512xbf16, #tpu.memory_space<vmem>>, vector<128x512xbf16>
      %261 = arith.extf %259 : vector<8x512xbf16> to vector<8x512xf32>
      %262 = arith.truncf %253 : vector<8x128xf32> to vector<8x128xbf16>
      %cst_64 = arith.constant dense<0.000000e+00> : vector<8x512xf32>
      %263 = tpu.matmul %262, %260, %cst_64 {dimension_numbers = #tpu.dot_dimension_numbers<[1], [0], [0], [1], [0, 0, 1, 1], [], []>} : vector<8x128xbf16>, vector<128x512xbf16>, vector<8x512xf32> -> vector<8x512xf32>
      %264 = arith.addf %261, %263 : vector<8x512xf32>
      %265 = vector.extract_strided_slice %264 {offsets = [0, 0], sizes = [8, 128], strides = [1, 1]} : vector<8x512xf32> to vector<8x128xf32>
      %266 = arith.negf %265 : vector<8x128xf32>
      %267 = math.exp %266 : vector<8x128xf32>
      %cst_65 = arith.constant 1.000000e+00 : f32
      %268 = vector.broadcast %cst_65 : f32 to vector<8x128xf32>
      %269 = arith.addf %268, %267 : vector<8x128xf32>
      %270 = arith.divf %268, %269 : vector<8x128xf32>
      %271 = vector.extract_strided_slice %264 {offsets = [0, 128], sizes = [8, 128], strides = [1, 1]} : vector<8x512xf32> to vector<8x128xf32>
      %272 = arith.negf %271 : vector<8x128xf32>
      %273 = math.exp %272 : vector<8x128xf32>
      %cst_66 = arith.constant 1.000000e+00 : f32
      %274 = vector.broadcast %cst_66 : f32 to vector<8x128xf32>
      %275 = arith.addf %274, %273 : vector<8x128xf32>
      %276 = arith.divf %274, %275 : vector<8x128xf32>
      %277 = vector.extract_strided_slice %264 {offsets = [0, 256], sizes = [8, 128], strides = [1, 1]} : vector<8x512xf32> to vector<8x128xf32>
      %278 = math.tanh %277 : vector<8x128xf32>
      %279 = vector.extract_strided_slice %264 {offsets = [0, 384], sizes = [8, 128], strides = [1, 1]} : vector<8x512xf32> to vector<8x128xf32>
      %280 = arith.negf %279 : vector<8x128xf32>
      %281 = math.exp %280 : vector<8x128xf32>
      %cst_67 = arith.constant 1.000000e+00 : f32
      %282 = vector.broadcast %cst_67 : f32 to vector<8x128xf32>
      %283 = arith.addf %282, %281 : vector<8x128xf32>
      %284 = arith.divf %282, %283 : vector<8x128xf32>
      %285 = arith.mulf %276, %251 : vector<8x128xf32>
      %286 = arith.mulf %270, %278 : vector<8x128xf32>
      %287 = arith.addf %285, %286 : vector<8x128xf32>
      %288 = math.tanh %287 : vector<8x128xf32>
      %289 = arith.mulf %284, %288 : vector<8x128xf32>
      %c0_68 = arith.constant 0 : index
      %c0_69 = arith.constant 0 : index
      %290 = vector.load %arg5[%c0_68, %c0_69] : memref<1x128xf32, #tpu.memory_space<vmem>>, vector<1x128xf32>
      %291 = vector.broadcast %290 : vector<1x128xf32> to vector<8x128xf32>
      %292 = arith.mulf %289, %291 : vector<8x128xf32>
      %cst_70 = arith.constant dense<0.000000e+00> : vector<8xf32>
      %293 = vector.multi_reduction <add>, %292, %cst_70 [1] : vector<8x128xf32> to vector<8xf32>
      %294 = vector.shape_cast %293 : vector<8xf32> to vector<8x1xf32>
      %c0_71 = arith.constant 0 : index
      %c0_72 = arith.constant 0 : index
      %295 = vector.load %arg6[%c0_71, %c0_72] : memref<8x1xf32, #tpu.memory_space<vmem>>, vector<8x1xf32>
      tpu.vector_store %arg6[%c0_71, %c0_72], %294 {strides = array<i32>} : memref<8x1xf32, #tpu.memory_space<vmem>>, vector<8x1xf32>,
    } else {
    }
    return
  }
  func.func @transform_0(%arg0: i32) -> (i32, i32, i32) {
    %c0_i32 = arith.constant 0 : i32
    %c0_i32_0 = arith.constant 0 : i32
    %c0_i32_1 = arith.constant 0 : i32
    return %arg0, %c0_i32, %c0_i32_0 : i32, i32, i32
  }
  func.func @transform_1(%arg0: i32) -> (i32, i32) {
    %c0_i32 = arith.constant 0 : i32
    %c0_i32_0 = arith.constant 0 : i32
    %c0_i32_1 = arith.constant 0 : i32
    return %c0_i32, %c0_i32_0 : i32, i32
  }
  func.func @transform_2(%arg0: i32) -> (i32, i32) {
    %c0_i32 = arith.constant 0 : i32
    %c0_i32_0 = arith.constant 0 : i32
    %c0_i32_1 = arith.constant 0 : i32
    return %c0_i32, %c0_i32_0 : i32, i32
  }
  func.func @transform_3(%arg0: i32) -> (i32, i32) {
    %c0_i32 = arith.constant 0 : i32
    %c0_i32_0 = arith.constant 0 : i32
    %c0_i32_1 = arith.constant 0 : i32
    return %c0_i32, %c0_i32_0 : i32, i32
  }
  func.func @transform_4(%arg0: i32) -> (i32, i32) {
    %c0_i32 = arith.constant 0 : i32
    %c0_i32_0 = arith.constant 0 : i32
    %c0_i32_1 = arith.constant 0 : i32
    return %c0_i32, %c0_i32_0 : i32, i32
  }
  func.func @transform_5(%arg0: i32) -> (i32, i32) {
    %c0_i32 = arith.constant 0 : i32
    %c0_i32_0 = arith.constant 0 : i32
    %c0_i32_1 = arith.constant 0 : i32
    return %c0_i32, %c0_i32_0 : i32, i32
  }
}

</mosaic_0001>

<llo_original>
// kernel: seq2seq_forward.1
$region0: #{seq2seq_forward.1}
  #allocation0 [shape = 'u32[]', space=smem, size = 0x4, offset = 0x4, fixed_abs, tag = 'smem constant byte address 0x4 - core index']
  #allocation1 [shape = 'u32[144,128]{1,0:T(1,128)}', space=vmem, size = 0x12000, scoped, tag = 'internal scratch']
  #allocation2 [shape = 'f32[8,128]{1,0:T(8,128)}', space=vmem, size = 0x1000, scoped, tag = 'scratch operand']
  #allocation3 [shape = 'f32[8,128]{1,0:T(8,128)}', space=vmem, size = 0x1000, scoped, tag = 'scratch operand']
  %s0 = inlined_call_operand.vmem [shape: bf16[8,8,512], index: 0, kind: input, shape index: {}]
  %s1 = inlined_call_operand.vmem [shape: bf16[8,512], index: 1, kind: input, shape index: {}]
  %s2 = inlined_call_operand.vmem [shape: bf16[128,512], index: 2, kind: input, shape index: {}]
  %s3 = inlined_call_operand.vmem [shape: bf16[128,512], index: 3, kind: input, shape index: {}]
  %s4 = inlined_call_operand.vmem [shape: f32[1,128], index: 4, kind: input, shape index: {}]
  %s5 = inlined_call_operand.vmem [shape: f32[8,1], index: 5, kind: output, shape index: {}]
  %s6 = sld [smem:[#allocation0]]
  $region38: #{seq2seq_forward.1} parent=0
    _
  %s8 = ssub.s32 1, %s6
  %s9 = scalar_select 0, %s8, %s6
  // Predicated region
  $region2: #{seq2seq_forward.1} parent=0 // pred_check
    _
  $region3: #{seq2seq_forward.1} parent=0 // pred_check_branch
    %11 = sbr.rel (0) target = $region5
  $region4: #{seq2seq_forward.1} parent=0 // pred_region
    _
  $region5: #{seq2seq_forward.1} parent=0 // pred_fallthru
    _
  // Predicated region
  $region6: #{seq2seq_forward.1} parent=0 // pred_check
    _
  $region7: #{seq2seq_forward.1} parent=0 // pred_check_branch
    %13 = sbr.rel (0) target = $region9
  $region8: #{seq2seq_forward.1} parent=0 // pred_region
    _
  $region9: #{seq2seq_forward.1} parent=0 // pred_fallthru
    _
  // Predicated region
  $region10: #{seq2seq_forward.1} parent=0 // pred_check
    _
  $region11: #{seq2seq_forward.1} parent=0 // pred_check_branch
    %15 = sbr.rel (0) target = $region13
  $region12: #{seq2seq_forward.1} parent=0 // pred_region
    _
  $region13: #{seq2seq_forward.1} parent=0 // pred_fallthru
    _
  // Predicated region
  $region14: #{seq2seq_forward.1} parent=0 // pred_check
    _
  $region15: #{seq2seq_forward.1} parent=0 // pred_check_branch
    %17 = sbr.rel (0) target = $region17
  $region16: #{seq2seq_forward.1} parent=0 // pred_region
    _
  $region17: #{seq2seq_forward.1} parent=0 // pred_fallthru
    _
  // Predicated region
  $region18: #{seq2seq_forward.1} parent=0 // pred_check
    _
  $region19: #{seq2seq_forward.1} parent=0 // pred_check_branch
    %19 = sbr.rel (0) target = $region21
  $region20: #{seq2seq_forward.1} parent=0 // pred_region
    _
  $region21: #{seq2seq_forward.1} parent=0 // pred_fallthru
    _
  %p21 = scmp.eq.s32.totalorder 0, 0
  // Predicated region
  $region22: #{seq2seq_forward.1} parent=0 // pred_check
    %p22 = pneg %p21
  $region23: #{seq2seq_forward.1} parent=0 // pred_check_branch
    %24 = sbr.rel (%p22) target = $region25
  $region24: #{seq2seq_forward.1} parent=0 // pred_region
    %25 = vst [vmem:[#allocation2] sm:$0xff] 0.0
    %26 = vst [vmem:[#allocation3] sm:$0xff] 0.0
  $region25: #{seq2seq_forward.1} parent=0 // pred_fallthru
    _
  %v27 = vld [vmem:[%s2] sm:$0xff]
  %v28 = vld [vmem:[%s2 + $0x8] sm:$0xff]
  %v29 = vld [vmem:[%s2 + $0x10] sm:$0xff]
  %v30 = vld [vmem:[%s2 + $0x18] sm:$0xff]
  %v31 = vld [vmem:[%s2 + $0x20] sm:$0xff]
  %v32 = vld [vmem:[%s2 + $0x28] sm:$0xff]
  %v33 = vld [vmem:[%s2 + $0x30] sm:$0xff]
  %v34 = vld [vmem:[%s2 + $0x38] sm:$0xff]
  %v35 = vld [vmem:[%s2 + $0x40] sm:$0xff]
  %v36 = vld [vmem:[%s2 + $0x48] sm:$0xff]
  %v37 = vld [vmem:[%s2 + $0x50] sm:$0xff]
  %v38 = vld [vmem:[%s2 + $0x58] sm:$0xff]
  %v39 = vld [vmem:[%s2 + $0x60] sm:$0xff]
  %v40 = vld [vmem:[%s2 + $0x68] sm:$0xff]
  %v41 = vld [vmem:[%s2 + $0x70] sm:$0xff]
  %v42 = vld [vmem:[%s2 + $0x78] sm:$0xff]
  %v43 = vld [vmem:[%s2 + $0x80] sm:$0xff]
  %v44 = vld [vmem:[%s2 + $0x88] sm:$0xff]
  %v45 = vld [vmem:[%s2 + $0x90] sm:$0xff]
  %v46 = vld [vmem:[%s2 + $0x98] sm:$0xff]
  %v47 = vld [vmem:[%s2 + $0xa0] sm:$0xff]
  %v48 = vld [vmem:[%s2 + $0xa8] sm:$0xff]
  %v49 = vld [vmem:[%s2 + $0xb0] sm:$0xff]
  %v50 = vld [vmem:[%s2 + $0xb8] sm:$0xff]
  %v51 = vld [vmem:[%s2 + $0xc0] sm:$0xff]
  %v52 = vld [vmem:[%s2 + $0xc8] sm:$0xff]
  %v53 = vld [vmem:[%s2 + $0xd0] sm:$0xff]
  %v54 = vld [vmem:[%s2 + $0xd8] sm:$0xff]
  %v55 = vld [vmem:[%s2 + $0xe0] sm:$0xff]
  %v56 = vld [vmem:[%s2 + $0xe8] sm:$0xff]
  %v57 = vld [vmem:[%s2 + $0xf0] sm:$0xff]
  %v58 = vld [vmem:[%s2 + $0xf8] sm:$0xff]
  %v59 = vld [vmem:[#allocation2] sm:$0xff]
  %v60 = vld [vmem:[#allocation3] sm:$0xff]
  %v61 = vld [vmem:[%s0] sm:$0xff]
  %v62 = vld [vmem:[%s0 + $0x8] sm:$0xff]
  %v63 = vunpack.c.l.bf16 %v61
  %v64 = vunpack.c.h.bf16 %v61
  %v65 = vunpack.c.l.bf16 %v62
  %v66 = vunpack.c.h.bf16 %v62
  %v67 = vpack.c.bf16 %v59, %v59
  %v100 = vunpack.c.l.b16 %v27
  %v101 = vunpack.c.h.b16 %v27
  %v102 = vunpack.c.l.b16 %v28
  %v103 = vunpack.c.h.b16 %v28
  %v104 = vunpack.c.l.b16 %v29
  %v105 = vunpack.c.h.b16 %v29
  %v106 = vunpack.c.l.b16 %v30
  %v107 = vunpack.c.h.b16 %v30
  %v108 = vunpack.c.l.b16 %v31
  %v109 = vunpack.c.h.b16 %v31
  %v110 = vunpack.c.l.b16 %v32
  %v111 = vunpack.c.h.b16 %v32
  %v112 = vunpack.c.l.b16 %v33
  %v113 = vunpack.c.h.b16 %v33
  %v114 = vunpack.c.l.b16 %v34
  %v115 = vunpack.c.h.b16 %v34
  %v116 = vunpack.c.l.b16 %v35
  %v117 = vunpack.c.h.b16 %v35
  %v118 = vunpack.c.l.b16 %v36
  %v119 = vunpack.c.h.b16 %v36
  %v120 = vunpack.c.l.b16 %v37
  %v121 = vunpack.c.h.b16 %v37
  %v122 = vunpack.c.l.b16 %v38
  %v123 = vunpack.c.h.b16 %v38
  %v124 = vunpack.c.l.b16 %v39
  %v125 = vunpack.c.h.b16 %v39
  %v126 = vunpack.c.l.b16 %v40
  %v127 = vunpack.c.h.b16 %v40
  %v128 = vunpack.c.l.b16 %v41
  %v129 = vunpack.c.h.b16 %v41
  %v130 = vunpack.c.l.b16 %v42
  %v131 = vunpack.c.h.b16 %v42
  %v132 = vunpack.c.l.b16 %v43
  %v133 = vunpack.c.h.b16 %v43
  %v134 = vunpack.c.l.b16 %v44
  %v135 = vunpack.c.h.b16 %v44
  %v136 = vunpack.c.l.b16 %v45
  %v137 = vunpack.c.h.b16 %v45
  %v138 = vunpack.c.l.b16 %v46
  %v139 = vunpack.c.h.b16 %v46
  %v140 = vunpack.c.l.b16 %v47
  %v141 = vunpack.c.h.b16 %v47
  %v142 = vunpack.c.l.b16 %v48
  %v143 = vunpack.c.h.b16 %v48
  %v144 = vunpack.c.l.b16 %v49
  %v145 = vunpack.c.h.b16 %v49
  %v146 = vunpack.c.l.b16 %v50
  %v147 = vunpack.c.h.b16 %v50
  %v148 = vunpack.c.l.b16 %v51
  %v149 = vunpack.c.h.b16 %v51
  %v150 = vunpack.c.l.b16 %v52
  %v151 = vunpack.c.h.b16 %v52
  %v152 = vunpack.c.l.b16 %v53
  %v153 = vunpack.c.h.b16 %v53
  %v154 = vunpack.c.l.b16 %v54
  %v155 = vunpack.c.h.b16 %v54
  %v156 = vunpack.c.l.b16 %v55
  %v157 = vunpack.c.h.b16 %v55
  %v158 = vunpack.c.l.b16 %v56
  %v159 = vunpack.c.h.b16 %v56
  %v160 = vunpack.c.l.b16 %v57
  %v161 = vunpack.c.h.b16 %v57
  %v162 = vunpack.c.l.b16 %v58
  %v163 = vunpack.c.h.b16 %v58
  %v164 = vpack.c.b16 %v104, %v100
  %v165 = vpack.c.b16 %v105, %v101
  %v166 = vpack.c.b16 %v106, %v102
  %v167 = vpack.c.b16 %v107, %v103
  %v168 = vpack.c.b16 %v112, %v108
  %v169 = vpack.c.b16 %v113, %v109
  %v170 = vpack.c.b16 %v114, %v110
  %v171 = vpack.c.b16 %v115, %v111
  %v172 = vpack.c.b16 %v120, %v116
  %v173 = vpack.c.b16 %v121, %v117
  %v174 = vpack.c.b16 %v122, %v118
  %v175 = vpack.c.b16 %v123, %v119
  %v176 = vpack.c.b16 %v128, %v124
  %v177 = vpack.c.b16 %v129, %v125
  %v178 = vpack.c.b16 %v130, %v126
  %v179 = vpack.c.b16 %v131, %v127
  %v180 = vpack.c.b16 %v136, %v132
  %v181 = vpack.c.b16 %v137, %v133
  %v182 = vpack.c.b16 %v138, %v134
  %v183 = vpack.c.b16 %v139, %v135
  %v184 = vpack.c.b16 %v144, %v140
  %v185 = vpack.c.b16 %v145, %v141
  %v186 = vpack.c.b16 %v146, %v142
  %v187 = vpack.c.b16 %v147, %v143
  %v188 = vpack.c.b16 %v152, %v148
  %v189 = vpack.c.b16 %v153, %v149
  %v190 = vpack.c.b16 %v154, %v150
  %v191 = vpack.c.b16 %v155, %v151
  %v192 = vpack.c.b16 %v160, %v156
  %v193 = vpack.c.b16 %v161, %v157
  %v194 = vpack.c.b16 %v162, %v158
  %v195 = vpack.c.b16 %v163, %v159
  %228 = vmatprep.subr.bf16.mxu0 %v165
  %229 = vmatpush1.bf16.msra.mxu0 %v164
  %230 = vmatprep.subr.bf16.mxu0 %v169
  %231 = vmatpush1.bf16.msra.mxu0 %v168
  %232 = vmatprep.subr.bf16.mxu0 %v173
  %233 = vmatpush1.bf16.msra.mxu0 %v172
  %234 = vmatprep.subr.bf16.mxu0 %v177
  %235 = vmatpush1.bf16.msra.mxu0 %v176
  %236 = vmatprep.subr.bf16.mxu0 %v181
  %237 = vmatpush1.bf16.msra.mxu0 %v180
  %238 = vmatprep.subr.bf16.mxu0 %v185
  %239 = vmatpush1.bf16.msra.mxu0 %v184
  %240 = vmatprep.subr.bf16.mxu0 %v189
  %241 = vmatpush1.bf16.msra.mxu0 %v188
  %242 = vmatprep.subr.bf16.mxu0 %v193
  %243 = vmatpush1.bf16.msra.mxu0 %v192
  %244 = vmatprep.subr.bf16.mxu0 0
  %245 = vmatpush1.bf16.msra.mxu0 0
  %246 = vmatprep.subr.bf16.mxu0 0
  %247 = vmatpush1.bf16.msra.mxu0 0
  %248 = vmatprep.subr.bf16.mxu0 0
  %249 = vmatpush1.bf16.msra.mxu0 0
  %250 = vmatprep.subr.bf16.mxu0 0
  %251 = vmatpush1.bf16.msra.mxu0 0
  %252 = vmatprep.subr.bf16.mxu0 0
  %253 = vmatpush1.bf16.msra.mxu0 0
  %254 = vmatprep.subr.bf16.mxu0 0
  %255 = vmatpush1.bf16.msra.mxu0 0
  %256 = vmatprep.subr.bf16.mxu0 0
  %257 = vmatpush1.bf16.msra.mxu0 0
  %258 = vmatprep.subr.bf16.mxu0 0
  %259 = vmatpush1.bf16.msra.mxu0 0
  %260 = vmatprep.mubr.bf16.mxu0 0
  %261 = vmatmul.mubr.bf16.gmra.mrb[0].mxu0 %v67
  %v262 = vpop.f32.mrb[0].mxu0
  %v263 = vadd.f32 0.0, %v262
  %v264 = vpop.f32.mrb[0].mxu0
  %v265 = vadd.f32 0.0, %v264
  %v266 = vpop.f32.mrb[0].mxu0
  %v267 = vpop.f32.mrb[0].mxu0
  %268 = vdwg.mxu0
  %269 = vmatprep.subr.bf16.mxu0 %v167
  %270 = vmatpush1.bf16.msra.mxu0 %v166
  %271 = vmatprep.subr.bf16.mxu0 %v171
  %272 = vmatpush1.bf16.msra.mxu0 %v170
  %273 = vmatprep.subr.bf16.mxu0 %v175
  %274 = vmatpush1.bf16.msra.mxu0 %v174
  %275 = vmatprep.subr.bf16.mxu0 %v179
  %276 = vmatpush1.bf16.msra.mxu0 %v178
  %277 = vmatprep.subr.bf16.mxu0 %v183
  %278 = vmatpush1.bf16.msra.mxu0 %v182
  %279 = vmatprep.subr.bf16.mxu0 %v187
  %280 = vmatpush1.bf16.msra.mxu0 %v186
  %281 = vmatprep.subr.bf16.mxu0 %v191
  %282 = vmatpush1.bf16.msra.mxu0 %v190
  %283 = vmatprep.subr.bf16.mxu0 %v195
  %284 = vmatpush1.bf16.msra.mxu0 %v194
  %285 = vmatprep.subr.bf16.mxu0 0
  %286 = vmatpush1.bf16.msra.mxu0 0
  %287 = vmatprep.subr.bf16.mxu0 0
  %288 = vmatpush1.bf16.msra.mxu0 0
  %289 = vmatprep.subr.bf16.mxu0 0
  %290 = vmatpush1.bf16.msra.mxu0 0
  %291 = vmatprep.subr.bf16.mxu0 0
  %292 = vmatpush1.bf16.msra.mxu0 0
  %293 = vmatprep.subr.bf16.mxu0 0
  %294 = vmatpush1.bf16.msra.mxu0 0
  %295 = vmatprep.subr.bf16.mxu0 0
  %296 = vmatpush1.bf16.msra.mxu0 0
  %297 = vmatprep.subr.bf16.mxu0 0
  %298 = vmatpush1.bf16.msra.mxu0 0
  %299 = vmatprep.subr.bf16.mxu0 0
  %300 = vmatpush1.bf16.msra.mxu0 0
  %301 = vmatprep.mubr.bf16.mxu0 0
  %302 = vmatmul.mubr.bf16.gmra.mrb[0].mxu0 %v67
  %v303 = vpop.f32.mrb[0].mxu0
  %v304 = vadd.f32 0.0, %v303
  %v305 = vpop.f32.mrb[0].mxu0
  %v306 = vadd.f32 0.0, %v305
  %v307 = vpop.f32.mrb[0].mxu0
  %v308 = vpop.f32.mrb[0].mxu0
  %309 = vdwg.mxu0
  %v310 = vadd.f32 %v63, %v263
  %v311 = vadd.f32 %v64, %v265
  %v312 = vadd.f32 %v65, %v304
  %v313 = vadd.f32 %v66, %v306
  %v314 = vxor.u32 %v310, 2147483648
  %v315 = vmul.f32 %v314, 1.442695
  %v316 = vpow.pop %v315
  %v317 = vadd.f32 %v316, 1.0
  %v318 = vrcp.pop %v317
  %v319 = vmul.f32 1.0, %v318
  %v320 = vxor.u32 %v311, 2147483648
  %v321 = vmul.f32 %v320, 1.442695
  %v322 = vpow.pop %v321
  %v323 = vadd.f32 %v322, 1.0
  %v324 = vrcp.pop %v323
  %v325 = vmul.f32 1.0, %v324
  %v326 = vtanh.pop %v312
  %v327 = vxor.u32 %v313, 2147483648
  %v328 = vmul.f32 %v327, 1.442695
  %v329 = vpow.pop %v328
  %v330 = vadd.f32 %v329, 1.0
  %v331 = vrcp.pop %v330
  %v332 = vmul.f32 1.0, %v331
  %v333 = vmul.f32 %v325, %v60
  %v334 = vmul.f32 %v319, %v326
  %v335 = vadd.f32 %v333, %v334
  %v336 = vtanh.pop %v335
  %v337 = vmul.f32 %v332, %v336
  %s338 = scalar_lea.vmem %s0, 16
  %v339 = vld [vmem:[%s338] sm:$0xff]
  %v340 = vld [vmem:[%s338 + $0x8] sm:$0xff]
  %v341 = vunpack.c.l.bf16 %v339
  %v342 = vunpack.c.h.bf16 %v339
  %v343 = vunpack.c.l.bf16 %v340
  %v344 = vunpack.c.h.bf16 %v340
  %v345 = vpack.c.bf16 %v337, %v337
  %346 = vmatprep.subr.bf16.mxu0 %v165
  %347 = vmatpush1.bf16.msra.mxu0 %v164
  %348 = vmatprep.subr.bf16.mxu0 %v169
  %349 = vmatpush1.bf16.msra.mxu0 %v168
  %350 = vmatprep.subr.bf16.mxu0 %v173
  %351 = vmatpush1.bf16.msra.mxu0 %v172
  %352 = vmatprep.subr.bf16.mxu0 %v177
  %353 = vmatpush1.bf16.msra.mxu0 %v176
  %354 = vmatprep.subr.bf16.mxu0 %v181
  %355 = vmatpush1.bf16.msra.mxu0 %v180
  %356 = vmatprep.subr.bf16.mxu0 %v185
  %357 = vmatpush1.bf16.msra.mxu0 %v184
  %358 = vmatprep.subr.bf16.mxu0 %v189
  %359 = vmatpush1.bf16.msra.mxu0 %v188
  %360 = vmatprep.subr.bf16.mxu0 %v193
  %361 = vmatpush1.bf16.msra.mxu0 %v192
  %362 = vmatprep.subr.bf16.mxu0 0
  %363 = vmatpush1.bf16.msra.mxu0 0
  %364 = vmatprep.subr.bf16.mxu0 0
  %365 = vmatpush1.bf16.msra.mxu0 0
  %366 = vmatprep.subr.bf16.mxu0 0
  %367 = vmatpush1.bf16.msra.mxu0 0
  %368 = vmatprep.subr.bf16.mxu0 0
  %369 = vmatpush1.bf16.msra.mxu0 0
  %370 = vmatprep.subr.bf16.mxu0 0
  %371 = vmatpush1.bf16.msra.mxu0 0
  %372 = vmatprep.subr.bf16.mxu0 0
  %373 = vmatpush1.bf16.msra.mxu0 0
  %374 = vmatprep.subr.bf16.mxu0 0
  %375 = vmatpush1.bf16.msra.mxu0 0
  %376 = vmatprep.subr.bf16.mxu0 0
  %377 = vmatpush1.bf16.msra.mxu0 0
  %378 = vmatprep.mubr.bf16.mxu0 0
  %379 = vmatmul.mubr.bf16.gmra.mrb[0].mxu0 %v345
  %v380 = vpop.f32.mrb[0].mxu0
  %v381 = vadd.f32 0.0, %v380
  %v382 = vpop.f32.mrb[0].mxu0
  %v383 = vadd.f32 0.0, %v382
  %v384 = vpop.f32.mrb[0].mxu0
  %v385 = vpop.f32.mrb[0].mxu0
  %386 = vdwg.mxu0
  %387 = vmatprep.subr.bf16.mxu0 %v167
  %388 = vmatpush1.bf16.msra.mxu0 %v166
  %389 = vmatprep.subr.bf16.mxu0 %v171
  %390 = vmatpush1.bf16.msra.mxu0 %v170
  %391 = vmatprep.subr.bf16.mxu0 %v175
  %392 = vmatpush1.bf16.msra.mxu0 %v174
  %393 = vmatprep.subr.bf16.mxu0 %v179
  %394 = vmatpush1.bf16.msra.mxu0 %v178
  %395 = vmatprep.subr.bf16.mxu0 %v183
  %396 = vmatpush1.bf16.msra.mxu0 %v182
  %397 = vmatprep.subr.bf16.mxu0 %v187
  %398 = vmatpush1.bf16.msra.mxu0 %v186
  %399 = vmatprep.subr.bf16.mxu0 %v191
  %400 = vmatpush1.bf16.msra.mxu0 %v190
  %401 = vmatprep.subr.bf16.mxu0 %v195
  %402 = vmatpush1.bf16.msra.mxu0 %v194
  %403 = vmatprep.subr.bf16.mxu0 0
  %404 = vmatpush1.bf16.msra.mxu0 0
  %405 = vmatprep.subr.bf16.mxu0 0
  %406 = vmatpush1.bf16.msra.mxu0 0
  %407 = vmatprep.subr.bf16.mxu0 0
  %408 = vmatpush1.bf16.msra.mxu0 0
  %409 = vmatprep.subr.bf16.mxu0 0
  %410 = vmatpush1.bf16.msra.mxu0 0
  %411 = vmatprep.subr.bf16.mxu0 0
  %412 = vmatpush1.bf16.msra.mxu0 0
  %413 = vmatprep.subr.bf16.mxu0 0
  %414 = vmatpush1.bf16.msra.mxu0 0
  %415 = vmatprep.subr.bf16.mxu0 0
  %416 = vmatpush1.bf16.msra.mxu0 0
  %417 = vmatprep.subr.bf16.mxu0 0
  %418 = vmatpush1.bf16.msra.mxu0 0
  %419 = vmatprep.mubr.bf16.mxu0 0
  %420 = vmatmul.mubr.bf16.gmra.mrb[0].mxu0 %v345
  %v421 = vpop.f32.mrb[0].mxu0
  %v422 = vadd.f32 0.0, %v421
  %v423 = vpop.f32.mrb[0].mxu0
  %v424 = vadd.f32 0.0, %v423
  %v425 = vpop.f32.mrb[0].mxu0
  %v426 = vpop.f32.mrb[0].mxu0
  %427 = vdwg.mxu0
  %v428 = vadd.f32 %v341, %v381
  %v429 = vadd.f32 %v342, %v383
  %v430 = vadd.f32 %v343, %v422
  %v431 = vadd.f32 %v344, %v424
  %v432 = vxor.u32 %v428, 2147483648
  %v433 = vmul.f32 %v432, 1.442695
  %v434 = vpow.pop %v433
  %v435 = vadd.f32 %v434, 1.0
  %v436 = vrcp.pop %v435
  %v437 = vmul.f32 1.0, %v436
  %v438 = vxor.u32 %v429, 2147483648
  %v439 = vmul.f32 %v438, 1.442695
  %v440 = vpow.pop %v439
  %v441 = vadd.f32 %v440, 1.0
  %v442 = vrcp.pop %v441
  %v443 = vmul.f32 1.0, %v442
  %v444 = vtanh.pop %v430
  %v445 = vxor.u32 %v431, 2147483648
  %v446 = vmul.f32 %v445, 1.442695
  %v447 = vpow.pop %v446
  %v448 = vadd.f32 %v447, 1.0
  %v449 = vrcp.pop %v448
  %v450 = vmul.f32 1.0, %v449
  %v451 = vmul.f32 %v443, %v335
  %v452 = vmul.f32 %v437, %v444
  %v453 = vadd.f32 %v451, %v452
  %v454 = vtanh.pop %v453
  %v455 = vmul.f32 %v450, %v454
  %s456 = scalar_lea.vmem %s0, 32
  %v457 = vld [vmem:[%s456] sm:$0xff]
  %v458 = vld [vmem:[%s456 + $0x8] sm:$0xff]
  %v459 = vunpack.c.l.bf16 %v457
  %v460 = vunpack.c.h.bf16 %v457
  %v461 = vunpack.c.l.bf16 %v458
  %v462 = vunpack.c.h.bf16 %v458
  %v463 = vpack.c.bf16 %v455, %v455
  %464 = vmatprep.subr.bf16.mxu0 %v165
  %465 = vmatpush1.bf16.msra.mxu0 %v164
  %466 = vmatprep.subr.bf16.mxu0 %v169
  %467 = vmatpush1.bf16.msra.mxu0 %v168
  %468 = vmatprep.subr.bf16.mxu0 %v173
  %469 = vmatpush1.bf16.msra.mxu0 %v172
  %470 = vmatprep.subr.bf16.mxu0 %v177
  %471 = vmatpush1.bf16.msra.mxu0 %v176
  %472 = vmatprep.subr.bf16.mxu0 %v181
  %473 = vmatpush1.bf16.msra.mxu0 %v180
  %474 = vmatprep.subr.bf16.mxu0 %v185
  %475 = vmatpush1.bf16.msra.mxu0 %v184
  %476 = vmatprep.subr.bf16.mxu0 %v189
  %477 = vmatpush1.bf16.msra.mxu0 %v188
  %478 = vmatprep.subr.bf16.mxu0 %v193
  %479 = vmatpush1.bf16.msra.mxu0 %v192
  %480 = vmatprep.subr.bf16.mxu0 0
  %481 = vmatpush1.bf16.msra.mxu0 0
  %482 = vmatprep.subr.bf16.mxu0 0
  %483 = vmatpush1.bf16.msra.mxu0 0
  %484 = vmatprep.subr.bf16.mxu0 0
  %485 = vmatpush1.bf16.msra.mxu0 0
  %486 = vmatprep.subr.bf16.mxu0 0
  %487 = vmatpush1.bf16.msra.mxu0 0
  %488 = vmatprep.subr.bf16.mxu0 0
  %489 = vmatpush1.bf16.msra.mxu0 0
  %490 = vmatprep.subr.bf16.mxu0 0
  %491 = vmatpush1.bf16.msra.mxu0 0
  %492 = vmatprep.subr.bf16.mxu0 0
  %493 = vmatpush1.bf16.msra.mxu0 0
  %494 = vmatprep.subr.bf16.mxu0 0
  %495 = vmatpush1.bf16.msra.mxu0 0
  %496 = vmatprep.mubr.bf16.mxu0 0
  %497 = vmatmul.mubr.bf16.gmra.mrb[0].mxu0 %v463
  %v498 = vpop.f32.mrb[0].mxu0
  %v499 = vadd.f32 0.0, %v498
  %v500 = vpop.f32.mrb[0].mxu0
  %v501 = vadd.f32 0.0, %v500
  %v502 = vpop.f32.mrb[0].mxu0
  %v503 = vpop.f32.mrb[0].mxu0
  %504 = vdwg.mxu0
  %505 = vmatprep.subr.bf16.mxu0 %v167
  %506 = vmatpush1.bf16.msra.mxu0 %v166
  %507 = vmatprep.subr.bf16.mxu0 %v171
  %508 = vmatpush1.bf16.msra.mxu0 %v170
  %509 = vmatprep.subr.bf16.mxu0 %v175
  %510 = vmatpush1.bf16.msra.mxu0 %v174
  %511 = vmatprep.subr.bf16.mxu0 %v179
  %512 = vmatpush1.bf16.msra.mxu0 %v178
  %513 = vmatprep.subr.bf16.mxu0 %v183
  %514 = vmatpush1.bf16.msra.mxu0 %v182
  %515 = vmatprep.subr.bf16.mxu0 %v187
  %516 = vmatpush1.bf16.msra.mxu0 %v186
  %517 = vmatprep.subr.bf16.mxu0 %v191
  %518 = vmatpush1.bf16.msra.mxu0 %v190
  %519 = vmatprep.subr.bf16.mxu0 %v195
  %520 = vmatpush1.bf16.msra.mxu0 %v194
  %521 = vmatprep.subr.bf16.mxu0 0
  %522 = vmatpush1.bf16.msra.mxu0 0
  %523 = vmatprep.subr.bf16.mxu0 0
  %524 = vmatpush1.bf16.msra.mxu0 0
  %525 = vmatprep.subr.bf16.mxu0 0
  %526 = vmatpush1.bf16.msra.mxu0 0
  %527 = vmatprep.subr.bf16.mxu0 0
  %528 = vmatpush1.bf16.msra.mxu0 0
  %529 = vmatprep.subr.bf16.mxu0 0
  %530 = vmatpush1.bf16.msra.mxu0 0
  %531 = vmatprep.subr.bf16.mxu0 0
  %532 = vmatpush1.bf16.msra.mxu0 0
  %533 = vmatprep.subr.bf16.mxu0 0
  %534 = vmatpush1.bf16.msra.mxu0 0
  %535 = vmatprep.subr.bf16.mxu0 0
  %536 = vmatpush1.bf16.msra.mxu0 0
  %537 = vmatprep.mubr.bf16.mxu0 0
  %538 = vmatmul.mubr.bf16.gmra.mrb[0].mxu0 %v463
  %v539 = vpop.f32.mrb[0].mxu0
  %v540 = vadd.f32 0.0, %v539
  %v541 = vpop.f32.mrb[0].mxu0
  %v542 = vadd.f32 0.0, %v541
  %v543 = vpop.f32.mrb[0].mxu0
  %v544 = vpop.f32.mrb[0].mxu0
  %545 = vdwg.mxu0
  %v546 = vadd.f32 %v459, %v499
  %v547 = vadd.f32 %v460, %v501
  %v548 = vadd.f32 %v461, %v540
  %v549 = vadd.f32 %v462, %v542
  %v550 = vxor.u32 %v546, 2147483648
  %v551 = vmul.f32 %v550, 1.442695
  %v552 = vpow.pop %v551
  %v553 = vadd.f32 %v552, 1.0
  %v554 = vrcp.pop %v553
  %v555 = vmul.f32 1.0, %v554
  %v556 = vxor.u32 %v547, 2147483648
  %v557 = vmul.f32 %v556, 1.442695
  %v558 = vpow.pop %v557
  %v559 = vadd.f32 %v558, 1.0
  %v560 = vrcp.pop %v559
  %v561 = vmul.f32 1.0, %v560
  %v562 = vtanh.pop %v548
  %v563 = vxor.u32 %v549, 2147483648
  %v564 = vmul.f32 %v563, 1.442695
  %v565 = vpow.pop %v564
  %v566 = vadd.f32 %v565, 1.0
  %v567 = vrcp.pop %v566
  %v568 = vmul.f32 1.0, %v567
  %v569 = vmul.f32 %v561, %v453
  %v570 = vmul.f32 %v555, %v562
  %v571 = vadd.f32 %v569, %v570
  %v572 = vtanh.pop %v571
  %v573 = vmul.f32 %v568, %v572
  %s574 = scalar_lea.vmem %s0, 48
  %v575 = vld [vmem:[%s574] sm:$0xff]
  %v576 = vld [vmem:[%s574 + $0x8] sm:$0xff]
  %v577 = vunpack.c.l.bf16 %v575
  %v578 = vunpack.c.h.bf16 %v575
  %v579 = vunpack.c.l.bf16 %v576
  %v580 = vunpack.c.h.bf16 %v576
  %v581 = vpack.c.bf16 %v573, %v573
  %582 = vmatprep.subr.bf16.mxu0 %v165
  %583 = vmatpush1.bf16.msra.mxu0 %v164
  %584 = vmatprep.subr.bf16.mxu0 %v169
  %585 = vmatpush1.bf16.msra.mxu0 %v168
  %586 = vmatprep.subr.bf16.mxu0 %v173
  %587 = vmatpush1.bf16.msra.mxu0 %v172
  %588 = vmatprep.subr.bf16.mxu0 %v177
  %589 = vmatpush1.bf16.msra.mxu0 %v176
  %590 = vmatprep.subr.bf16.mxu0 %v181
  %591 = vmatpush1.bf16.msra.mxu0 %v180
  %592 = vmatprep.subr.bf16.mxu0 %v185
  %593 = vmatpush1.bf16.msra.mxu0 %v184
  %594 = vmatprep.subr.bf16.mxu0 %v189
  %595 = vmatpush1.bf16.msra.mxu0 %v188
  %596 = vmatprep.subr.bf16.mxu0 %v193
  %597 = vmatpush1.bf16.msra.mxu0 %v192
  %598 = vmatprep.subr.bf16.mxu0 0
  %599 = vmatpush1.bf16.msra.mxu0 0
  %600 = vmatprep.subr.bf16.mxu0 0
  %601 = vmatpush1.bf16.msra.mxu0 0
  %602 = vmatprep.subr.bf16.mxu0 0
  %603 = vmatpush1.bf16.msra.mxu0 0
  %604 = vmatprep.subr.bf16.mxu0 0
  %605 = vmatpush1.bf16.msra.mxu0 0
  %606 = vmatprep.subr.bf16.mxu0 0
  %607 = vmatpush1.bf16.msra.mxu0 0
  %608 = vmatprep.subr.bf16.mxu0 0
  %609 = vmatpush1.bf16.msra.mxu0 0
  %610 = vmatprep.subr.bf16.mxu0 0
  %611 = vmatpush1.bf16.msra.mxu0 0
  %612 = vmatprep.subr.bf16.mxu0 0
  %613 = vmatpush1.bf16.msra.mxu0 0
  %614 = vmatprep.mubr.bf16.mxu0 0
  %615 = vmatmul.mubr.bf16.gmra.mrb[0].mxu0 %v581
  %v616 = vpop.f32.mrb[0].mxu0
  %v617 = vadd.f32 0.0, %v616
  %v618 = vpop.f32.mrb[0].mxu0
  %v619 = vadd.f32 0.0, %v618
  %v620 = vpop.f32.mrb[0].mxu0
  %v621 = vpop.f32.mrb[0].mxu0
  %622 = vdwg.mxu0
  %623 = vmatprep.subr.bf16.mxu0 %v167
  %624 = vmatpush1.bf16.msra.mxu0 %v166
  %625 = vmatprep.subr.bf16.mxu0 %v171
  %626 = vmatpush1.bf16.msra.mxu0 %v170
  %627 = vmatprep.subr.bf16.mxu0 %v175
  %628 = vmatpush1.bf16.msra.mxu0 %v174
  %629 = vmatprep.subr.bf16.mxu0 %v179
  %630 = vmatpush1.bf16.msra.mxu0 %v178
  %631 = vmatprep.subr.bf16.mxu0 %v183
  %632 = vmatpush1.bf16.msra.mxu0 %v182
  %633 = vmatprep.subr.bf16.mxu0 %v187
  %634 = vmatpush1.bf16.msra.mxu0 %v186
  %635 = vmatprep.subr.bf16.mxu0 %v191
  %636 = vmatpush1.bf16.msra.mxu0 %v190
  %637 = vmatprep.subr.bf16.mxu0 %v195
  %638 = vmatpush1.bf16.msra.mxu0 %v194
  %639 = vmatprep.subr.bf16.mxu0 0
  %640 = vmatpush1.bf16.msra.mxu0 0
  %641 = vmatprep.subr.bf16.mxu0 0
  %642 = vmatpush1.bf16.msra.mxu0 0
  %643 = vmatprep.subr.bf16.mxu0 0
  %644 = vmatpush1.bf16.msra.mxu0 0
  %645 = vmatprep.subr.bf16.mxu0 0
  %646 = vmatpush1.bf16.msra.mxu0 0
  %647 = vmatprep.subr.bf16.mxu0 0
  %648 = vmatpush1.bf16.msra.mxu0 0
  %649 = vmatprep.subr.bf16.mxu0 0
  %650 = vmatpush1.bf16.msra.mxu0 0
  %651 = vmatprep.subr.bf16.mxu0 0
  %652 = vmatpush1.bf16.msra.mxu0 0
  %653 = vmatprep.subr.bf16.mxu0 0
  %654 = vmatpush1.bf16.msra.mxu0 0
  %655 = vmatprep.mubr.bf16.mxu0 0
  %656 = vmatmul.mubr.bf16.gmra.mrb[0].mxu0 %v581
  %v657 = vpop.f32.mrb[0].mxu0
  %v658 = vadd.f32 0.0, %v657
  %v659 = vpop.f32.mrb[0].mxu0
  %v660 = vadd.f32 0.0, %v659
  %v661 = vpop.f32.mrb[0].mxu0
  %v662 = vpop.f32.mrb[0].mxu0
  %663 = vdwg.mxu0
  %v664 = vadd.f32 %v577, %v617
  %v665 = vadd.f32 %v578, %v619
  %v666 = vadd.f32 %v579, %v658
  %v667 = vadd.f32 %v580, %v660
  %v668 = vxor.u32 %v664, 2147483648
  %v669 = vmul.f32 %v668, 1.442695
  %v670 = vpow.pop %v669
  %v671 = vadd.f32 %v670, 1.0
  %v672 = vrcp.pop %v671
  %v673 = vmul.f32 1.0, %v672
  %v674 = vxor.u32 %v665, 2147483648
  %v675 = vmul.f32 %v674, 1.442695
  %v676 = vpow.pop %v675
  %v677 = vadd.f32 %v676, 1.0
  %v678 = vrcp.pop %v677
  %v679 = vmul.f32 1.0, %v678
  %v680 = vtanh.pop %v666
  %v681 = vxor.u32 %v667, 2147483648
  %v682 = vmul.f32 %v681, 1.442695
  %v683 = vpow.pop %v682
  %v684 = vadd.f32 %v683, 1.0
  %v685 = vrcp.pop %v684
  %v686 = vmul.f32 1.0, %v685
  %v687 = vmul.f32 %v679, %v571
  %v688 = vmul.f32 %v673, %v680
  %v689 = vadd.f32 %v687, %v688
  %v690 = vtanh.pop %v689
  %v691 = vmul.f32 %v686, %v690
  %s692 = scalar_lea.vmem %s0, 64
  %v693 = vld [vmem:[%s692] sm:$0xff]
  %v694 = vld [vmem:[%s692 + $0x8] sm:$0xff]
  %v695 = vunpack.c.l.bf16 %v693
  %v696 = vunpack.c.h.bf16 %v693
  %v697 = vunpack.c.l.bf16 %v694
  %v698 = vunpack.c.h.bf16 %v694
  %v699 = vpack.c.bf16 %v691, %v691
  %700 = vmatprep.subr.bf16.mxu0 %v165
  %701 = vmatpush1.bf16.msra.mxu0 %v164
  %702 = vmatprep.subr.bf16.mxu0 %v169
  %703 = vmatpush1.bf16.msra.mxu0 %v168
  %704 = vmatprep.subr.bf16.mxu0 %v173
  %705 = vmatpush1.bf16.msra.mxu0 %v172
  %706 = vmatprep.subr.bf16.mxu0 %v177
  %707 = vmatpush1.bf16.msra.mxu0 %v176
  %708 = vmatprep.subr.bf16.mxu0 %v181
  %709 = vmatpush1.bf16.msra.mxu0 %v180
  %710 = vmatprep.subr.bf16.mxu0 %v185
  %711 = vmatpush1.bf16.msra.mxu0 %v184
  %712 = vmatprep.subr.bf16.mxu0 %v189
  %713 = vmatpush1.bf16.msra.mxu0 %v188
  %714 = vmatprep.subr.bf16.mxu0 %v193
  %715 = vmatpush1.bf16.msra.mxu0 %v192
  %716 = vmatprep.subr.bf16.mxu0 0
  %717 = vmatpush1.bf16.msra.mxu0 0
  %718 = vmatprep.subr.bf16.mxu0 0
  %719 = vmatpush1.bf16.msra.mxu0 0
  %720 = vmatprep.subr.bf16.mxu0 0
  %721 = vmatpush1.bf16.msra.mxu0 0
  %722 = vmatprep.subr.bf16.mxu0 0
  %723 = vmatpush1.bf16.msra.mxu0 0
  %724 = vmatprep.subr.bf16.mxu0 0
  %725 = vmatpush1.bf16.msra.mxu0 0
  %726 = vmatprep.subr.bf16.mxu0 0
  %727 = vmatpush1.bf16.msra.mxu0 0
  %728 = vmatprep.subr.bf16.mxu0 0
  %729 = vmatpush1.bf16.msra.mxu0 0
  %730 = vmatprep.subr.bf16.mxu0 0
  %731 = vmatpush1.bf16.msra.mxu0 0
  %732 = vmatprep.mubr.bf16.mxu0 0
  %733 = vmatmul.mubr.bf16.gmra.mrb[0].mxu0 %v699
  %v734 = vpop.f32.mrb[0].mxu0
  %v735 = vadd.f32 0.0, %v734
  %v736 = vpop.f32.mrb[0].mxu0
  %v737 = vadd.f32 0.0, %v736
  %v738 = vpop.f32.mrb[0].mxu0
  %v739 = vpop.f32.mrb[0].mxu0
  %740 = vdwg.mxu0
  %741 = vmatprep.subr.bf16.mxu0 %v167
  %742 = vmatpush1.bf16.msra.mxu0 %v166
  %743 = vmatprep.subr.bf16.mxu0 %v171
  %744 = vmatpush1.bf16.msra.mxu0 %v170
  %745 = vmatprep.subr.bf16.mxu0 %v175
  %746 = vmatpush1.bf16.msra.mxu0 %v174
  %747 = vmatprep.subr.bf16.mxu0 %v179
  %748 = vmatpush1.bf16.msra.mxu0 %v178
  %749 = vmatprep.subr.bf16.mxu0 %v183
  %750 = vmatpush1.bf16.msra.mxu0 %v182
  %751 = vmatprep.subr.bf16.mxu0 %v187
  %752 = vmatpush1.bf16.msra.mxu0 %v186
  %753 = vmatprep.subr.bf16.mxu0 %v191
  %754 = vmatpush1.bf16.msra.mxu0 %v190
  %755 = vmatprep.subr.bf16.mxu0 %v195
  %756 = vmatpush1.bf16.msra.mxu0 %v194
  %757 = vmatprep.subr.bf16.mxu0 0
  %758 = vmatpush1.bf16.msra.mxu0 0
  %759 = vmatprep.subr.bf16.mxu0 0
  %760 = vmatpush1.bf16.msra.mxu0 0
  %761 = vmatprep.subr.bf16.mxu0 0
  %762 = vmatpush1.bf16.msra.mxu0 0
  %763 = vmatprep.subr.bf16.mxu0 0
  %764 = vmatpush1.bf16.msra.mxu0 0
  %765 = vmatprep.subr.bf16.mxu0 0
  %766 = vmatpush1.bf16.msra.mxu0 0
  %767 = vmatprep.subr.bf16.mxu0 0
  %768 = vmatpush1.bf16.msra.mxu0 0
  %769 = vmatprep.subr.bf16.mxu0 0
  %770 = vmatpush1.bf16.msra.mxu0 0
  %771 = vmatprep.subr.bf16.mxu0 0
  %772 = vmatpush1.bf16.msra.mxu0 0
  %773 = vmatprep.mubr.bf16.mxu0 0
  %774 = vmatmul.mubr.bf16.gmra.mrb[0].mxu0 %v699
  %v775 = vpop.f32.mrb[0].mxu0
  %v776 = vadd.f32 0.0, %v775
  %v777 = vpop.f32.mrb[0].mxu0
  %v778 = vadd.f32 0.0, %v777
  %v779 = vpop.f32.mrb[0].mxu0
  %v780 = vpop.f32.mrb[0].mxu0
  %781 = vdwg.mxu0
  %v782 = vadd.f32 %v695, %v735
  %v783 = vadd.f32 %v696, %v737
  %v784 = vadd.f32 %v697, %v776
  %v785 = vadd.f32 %v698, %v778
  %v786 = vxor.u32 %v782, 2147483648
  %v787 = vmul.f32 %v786, 1.442695
  %v788 = vpow.pop %v787
  %v789 = vadd.f32 %v788, 1.0
  %v790 = vrcp.pop %v789
  %v791 = vmul.f32 1.0, %v790
  %v792 = vxor.u32 %v783, 2147483648
  %v793 = vmul.f32 %v792, 1.442695
  %v794 = vpow.pop %v793
  %v795 = vadd.f32 %v794, 1.0
  %v796 = vrcp.pop %v795
  %v797 = vmul.f32 1.0, %v796
  %v798 = vtanh.pop %v784
  %v799 = vxor.u32 %v785, 2147483648
  %v800 = vmul.f32 %v799, 1.442695
  %v801 = vpow.pop %v800
  %v802 = vadd.f32 %v801, 1.0
  %v803 = vrcp.pop %v802
  %v804 = vmul.f32 1.0, %v803
  %v805 = vmul.f32 %v797, %v689
  %v806 = vmul.f32 %v791, %v798
  %v807 = vadd.f32 %v805, %v806
  %v808 = vtanh.pop %v807
  %v809 = vmul.f32 %v804, %v808
  %s810 = scalar_lea.vmem %s0, 80
  %v811 = vld [vmem:[%s810] sm:$0xff]
  %v812 = vld [vmem:[%s810 + $0x8] sm:$0xff]
  %v813 = vunpack.c.l.bf16 %v811
  %v814 = vunpack.c.h.bf16 %v811
  %v815 = vunpack.c.l.bf16 %v812
  %v816 = vunpack.c.h.bf16 %v812
  %v817 = vpack.c.bf16 %v809, %v809
  %818 = vmatprep.subr.bf16.mxu0 %v165
  %819 = vmatpush1.bf16.msra.mxu0 %v164
  %820 = vmatprep.subr.bf16.mxu0 %v169
  %821 = vmatpush1.bf16.msra.mxu0 %v168
  %822 = vmatprep.subr.bf16.mxu0 %v173
  %823 = vmatpush1.bf16.msra.mxu0 %v172
  %824 = vmatprep.subr.bf16.mxu0 %v177
  %825 = vmatpush1.bf16.msra.mxu0 %v176
  %826 = vmatprep.subr.bf16.mxu0 %v181
  %827 = vmatpush1.bf16.msra.mxu0 %v180
  %828 = vmatprep.subr.bf16.mxu0 %v185
  %829 = vmatpush1.bf16.msra.mxu0 %v184
  %830 = vmatprep.subr.bf16.mxu0 %v189
  %831 = vmatpush1.bf16.msra.mxu0 %v188
  %832 = vmatprep.subr.bf16.mxu0 %v193
  %833 = vmatpush1.bf16.msra.mxu0 %v192
  %834 = vmatprep.subr.bf16.mxu0 0
  %835 = vmatpush1.bf16.msra.mxu0 0
  %836 = vmatprep.subr.bf16.mxu0 0
  %837 = vmatpush1.bf16.msra.mxu0 0
  %838 = vmatprep.subr.bf16.mxu0 0
  %839 = vmatpush1.bf16.msra.mxu0 0
  %840 = vmatprep.subr.bf16.mxu0 0
  %841 = vmatpush1.bf16.msra.mxu0 0
  %842 = vmatprep.subr.bf16.mxu0 0
  %843 = vmatpush1.bf16.msra.mxu0 0
  %844 = vmatprep.subr.bf16.mxu0 0
  %845 = vmatpush1.bf16.msra.mxu0 0
  %846 = vmatprep.subr.bf16.mxu0 0
  %847 = vmatpush1.bf16.msra.mxu0 0
  %848 = vmatprep.subr.bf16.mxu0 0
  %849 = vmatpush1.bf16.msra.mxu0 0
  %850 = vmatprep.mubr.bf16.mxu0 0
  %851 = vmatmul.mubr.bf16.gmra.mrb[0].mxu0 %v817
  %v852 = vpop.f32.mrb[0].mxu0
  %v853 = vadd.f32 0.0, %v852
  %v854 = vpop.f32.mrb[0].mxu0
  %v855 = vadd.f32 0.0, %v854
  %v856 = vpop.f32.mrb[0].mxu0
  %v857 = vpop.f32.mrb[0].mxu0
  %858 = vdwg.mxu0
  %859 = vmatprep.subr.bf16.mxu0 %v167
  %860 = vmatpush1.bf16.msra.mxu0 %v166
  %861 = vmatprep.subr.bf16.mxu0 %v171
  %862 = vmatpush1.bf16.msra.mxu0 %v170
  %863 = vmatprep.subr.bf16.mxu0 %v175
  %864 = vmatpush1.bf16.msra.mxu0 %v174
  %865 = vmatprep.subr.bf16.mxu0 %v179
  %866 = vmatpush1.bf16.msra.mxu0 %v178
  %867 = vmatprep.subr.bf16.mxu0 %v183
  %868 = vmatpush1.bf16.msra.mxu0 %v182
  %869 = vmatprep.subr.bf16.mxu0 %v187
  %870 = vmatpush1.bf16.msra.mxu0 %v186
  %871 = vmatprep.subr.bf16.mxu0 %v191
  %872 = vmatpush1.bf16.msra.mxu0 %v190
  %873 = vmatprep.subr.bf16.mxu0 %v195
  %874 = vmatpush1.bf16.msra.mxu0 %v194
  %875 = vmatprep.subr.bf16.mxu0 0
  %876 = vmatpush1.bf16.msra.mxu0 0
  %877 = vmatprep.subr.bf16.mxu0 0
  %878 = vmatpush1.bf16.msra.mxu0 0
  %879 = vmatprep.subr.bf16.mxu0 0
  %880 = vmatpush1.bf16.msra.mxu0 0
  %881 = vmatprep.subr.bf16.mxu0 0
  %882 = vmatpush1.bf16.msra.mxu0 0
  %883 = vmatprep.subr.bf16.mxu0 0
  %884 = vmatpush1.bf16.msra.mxu0 0
  %885 = vmatprep.subr.bf16.mxu0 0
  %886 = vmatpush1.bf16.msra.mxu0 0
  %887 = vmatprep.subr.bf16.mxu0 0
  %888 = vmatpush1.bf16.msra.mxu0 0
  %889 = vmatprep.subr.bf16.mxu0 0
  %890 = vmatpush1.bf16.msra.mxu0 0
  %891 = vmatprep.mubr.bf16.mxu0 0
  %892 = vmatmul.mubr.bf16.gmra.mrb[0].mxu0 %v817
  %v893 = vpop.f32.mrb[0].mxu0
  %v894 = vadd.f32 0.0, %v893
  %v895 = vpop.f32.mrb[0].mxu0
  %v896 = vadd.f32 0.0, %v895
  %v897 = vpop.f32.mrb[0].mxu0
  %v898 = vpop.f32.mrb[0].mxu0
  %899 = vdwg.mxu0
  %v900 = vadd.f32 %v813, %v853
  %v901 = vadd.f32 %v814, %v855
  %v902 = vadd.f32 %v815, %v894
  %v903 = vadd.f32 %v816, %v896
  %v904 = vxor.u32 %v900, 2147483648
  %v905 = vmul.f32 %v904, 1.442695
  %v906 = vpow.pop %v905
  %v907 = vadd.f32 %v906, 1.0
  %v908 = vrcp.pop %v907
  %v909 = vmul.f32 1.0, %v908
  %v910 = vxor.u32 %v901, 2147483648
  %v911 = vmul.f32 %v910, 1.442695
  %v912 = vpow.pop %v911
  %v913 = vadd.f32 %v912, 1.0
  %v914 = vrcp.pop %v913
  %v915 = vmul.f32 1.0, %v914
  %v916 = vtanh.pop %v902
  %v917 = vxor.u32 %v903, 2147483648
  %v918 = vmul.f32 %v917, 1.442695
  %v919 = vpow.pop %v918
  %v920 = vadd.f32 %v919, 1.0
  %v921 = vrcp.pop %v920
  %v922 = vmul.f32 1.0, %v921
  %v923 = vmul.f32 %v915, %v807
  %v924 = vmul.f32 %v909, %v916
  %v925 = vadd.f32 %v923, %v924
  %v926 = vtanh.pop %v925
  %v927 = vmul.f32 %v922, %v926
  %s928 = scalar_lea.vmem %s0, 96
  %v929 = vld [vmem:[%s928] sm:$0xff]
  %v930 = vld [vmem:[%s928 + $0x8] sm:$0xff]
  %v931 = vunpack.c.l.bf16 %v929
  %v932 = vunpack.c.h.bf16 %v929
  %v933 = vunpack.c.l.bf16 %v930
  %v934 = vunpack.c.h.bf16 %v930
  %v935 = vpack.c.bf16 %v927, %v927
  %936 = vmatprep.subr.bf16.mxu0 %v165
  %937 = vmatpush1.bf16.msra.mxu0 %v164
  %938 = vmatprep.subr.bf16.mxu0 %v169
  %939 = vmatpush1.bf16.msra.mxu0 %v168
  %940 = vmatprep.subr.bf16.mxu0 %v173
  %941 = vmatpush1.bf16.msra.mxu0 %v172
  %942 = vmatprep.subr.bf16.mxu0 %v177
  %943 = vmatpush1.bf16.msra.mxu0 %v176
  %944 = vmatprep.subr.bf16.mxu0 %v181
  %945 = vmatpush1.bf16.msra.mxu0 %v180
  %946 = vmatprep.subr.bf16.mxu0 %v185
  %947 = vmatpush1.bf16.msra.mxu0 %v184
  %948 = vmatprep.subr.bf16.mxu0 %v189
  %949 = vmatpush1.bf16.msra.mxu0 %v188
  %950 = vmatprep.subr.bf16.mxu0 %v193
  %951 = vmatpush1.bf16.msra.mxu0 %v192
  %952 = vmatprep.subr.bf16.mxu0 0
  %953 = vmatpush1.bf16.msra.mxu0 0
  %954 = vmatprep.subr.bf16.mxu0 0
  %955 = vmatpush1.bf16.msra.mxu0 0
  %956 = vmatprep.subr.bf16.mxu0 0
  %957 = vmatpush1.bf16.msra.mxu0 0
  %958 = vmatprep.subr.bf16.mxu0 0
  %959 = vmatpush1.bf16.msra.mxu0 0
  %960 = vmatprep.subr.bf16.mxu0 0
  %961 = vmatpush1.bf16.msra.mxu0 0
  %962 = vmatprep.subr.bf16.mxu0 0
  %963 = vmatpush1.bf16.msra.mxu0 0
  %964 = vmatprep.subr.bf16.mxu0 0
  %965 = vmatpush1.bf16.msra.mxu0 0
  %966 = vmatprep.subr.bf16.mxu0 0
  %967 = vmatpush1.bf16.msra.mxu0 0
  %968 = vmatprep.mubr.bf16.mxu0 0
  %969 = vmatmul.mubr.bf16.gmra.mrb[0].mxu0 %v935
  %v970 = vpop.f32.mrb[0].mxu0
  %v971 = vadd.f32 0.0, %v970
  %v972 = vpop.f32.mrb[0].mxu0
  %v973 = vadd.f32 0.0, %v972
  %v974 = vpop.f32.mrb[0].mxu0
  %v975 = vpop.f32.mrb[0].mxu0
  %976 = vdwg.mxu0
  %977 = vmatprep.subr.bf16.mxu0 %v167
  %978 = vmatpush1.bf16.msra.mxu0 %v166
  %979 = vmatprep.subr.bf16.mxu0 %v171
  %980 = vmatpush1.bf16.msra.mxu0 %v170
  %981 = vmatprep.subr.bf16.mxu0 %v175
  %982 = vmatpush1.bf16.msra.mxu0 %v174
  %983 = vmatprep.subr.bf16.mxu0 %v179
  %984 = vmatpush1.bf16.msra.mxu0 %v178
  %985 = vmatprep.subr.bf16.mxu0 %v183
  %986 = vmatpush1.bf16.msra.mxu0 %v182
  %987 = vmatprep.subr.bf16.mxu0 %v187
  %988 = vmatpush1.bf16.msra.mxu0 %v186
  %989 = vmatprep.subr.bf16.mxu0 %v191
  %990 = vmatpush1.bf16.msra.mxu0 %v190
  %991 = vmatprep.subr.bf16.mxu0 %v195
  %992 = vmatpush1.bf16.msra.mxu0 %v194
  %993 = vmatprep.subr.bf16.mxu0 0
  %994 = vmatpush1.bf16.msra.mxu0 0
  %995 = vmatprep.subr.bf16.mxu0 0
  %996 = vmatpush1.bf16.msra.mxu0 0
  %997 = vmatprep.subr.bf16.mxu0 0
  %998 = vmatpush1.bf16.msra.mxu0 0
  %999 = vmatprep.subr.bf16.mxu0 0
  %1000 = vmatpush1.bf16.msra.mxu0 0
  %1001 = vmatprep.subr.bf16.mxu0 0
  %1002 = vmatpush1.bf16.msra.mxu0 0
  %1003 = vmatprep.subr.bf16.mxu0 0
  %1004 = vmatpush1.bf16.msra.mxu0 0
  %1005 = vmatprep.subr.bf16.mxu0 0
  %1006 = vmatpush1.bf16.msra.mxu0 0
  %1007 = vmatprep.subr.bf16.mxu0 0
  %1008 = vmatpush1.bf16.msra.mxu0 0
  %1009 = vmatprep.mubr.bf16.mxu0 0
  %1010 = vmatmul.mubr.bf16.gmra.mrb[0].mxu0 %v935
  %v1011 = vpop.f32.mrb[0].mxu0
  %v1012 = vadd.f32 0.0, %v1011
  %v1013 = vpop.f32.mrb[0].mxu0
  %v1014 = vadd.f32 0.0, %v1013
  %v1015 = vpop.f32.mrb[0].mxu0
  %v1016 = vpop.f32.mrb[0].mxu0
  %1017 = vdwg.mxu0
  %v1018 = vadd.f32 %v931, %v971
  %v1019 = vadd.f32 %v932, %v973
  %v1020 = vadd.f32 %v933, %v1012
  %v1021 = vadd.f32 %v934, %v1014
  %v1022 = vxor.u32 %v1018, 2147483648
  %v1023 = vmul.f32 %v1022, 1.442695
  %v1024 = vpow.pop %v1023
  %v1025 = vadd.f32 %v1024, 1.0
  %v1026 = vrcp.pop %v1025
  %v1027 = vmul.f32 1.0, %v1026
  %v1028 = vxor.u32 %v1019, 2147483648
  %v1029 = vmul.f32 %v1028, 1.442695
  %v1030 = vpow.pop %v1029
  %v1031 = vadd.f32 %v1030, 1.0
  %v1032 = vrcp.pop %v1031
  %v1033 = vmul.f32 1.0, %v1032
  %v1034 = vtanh.pop %v1020
  %v1035 = vxor.u32 %v1021, 2147483648
  %v1036 = vmul.f32 %v1035, 1.442695
  %v1037 = vpow.pop %v1036
  %v1038 = vadd.f32 %v1037, 1.0
  %v1039 = vrcp.pop %v1038
  %v1040 = vmul.f32 1.0, %v1039
  %v1041 = vmul.f32 %v1033, %v925
  %v1042 = vmul.f32 %v1027, %v1034
  %v1043 = vadd.f32 %v1041, %v1042
  %v1044 = vtanh.pop %v1043
  %v1045 = vmul.f32 %v1040, %v1044
  %s1046 = scalar_lea.vmem %s0, 112
  %v1047 = vld [vmem:[%s1046] sm:$0xff]
  %v1048 = vld [vmem:[%s1046 + $0x8] sm:$0xff]
  %v1049 = vunpack.c.l.bf16 %v1047
  %v1050 = vunpack.c.h.bf16 %v1047
  %v1051 = vunpack.c.l.bf16 %v1048
  %v1052 = vunpack.c.h.bf16 %v1048
  %v1053 = vpack.c.bf16 %v1045, %v1045
  %1054 = vmatprep.subr.bf16.mxu0 %v165
  %1055 = vmatpush1.bf16.msra.mxu0 %v164
  %1056 = vmatprep.subr.bf16.mxu0 %v169
  %1057 = vmatpush1.bf16.msra.mxu0 %v168
  %1058 = vmatprep.subr.bf16.mxu0 %v173
  %1059 = vmatpush1.bf16.msra.mxu0 %v172
  %1060 = vmatprep.subr.bf16.mxu0 %v177
  %1061 = vmatpush1.bf16.msra.mxu0 %v176
  %1062 = vmatprep.subr.bf16.mxu0 %v181
  %1063 = vmatpush1.bf16.msra.mxu0 %v180
  %1064 = vmatprep.subr.bf16.mxu0 %v185
  %1065 = vmatpush1.bf16.msra.mxu0 %v184
  %1066 = vmatprep.subr.bf16.mxu0 %v189
  %1067 = vmatpush1.bf16.msra.mxu0 %v188
  %1068 = vmatprep.subr.bf16.mxu0 %v193
  %1069 = vmatpush1.bf16.msra.mxu0 %v192
  %1070 = vmatprep.subr.bf16.mxu0 0
  %1071 = vmatpush1.bf16.msra.mxu0 0
  %1072 = vmatprep.subr.bf16.mxu0 0
  %1073 = vmatpush1.bf16.msra.mxu0 0
  %1074 = vmatprep.subr.bf16.mxu0 0
  %1075 = vmatpush1.bf16.msra.mxu0 0
  %1076 = vmatprep.subr.bf16.mxu0 0
  %1077 = vmatpush1.bf16.msra.mxu0 0
  %1078 = vmatprep.subr.bf16.mxu0 0
  %1079 = vmatpush1.bf16.msra.mxu0 0
  %1080 = vmatprep.subr.bf16.mxu0 0
  %1081 = vmatpush1.bf16.msra.mxu0 0
  %1082 = vmatprep.subr.bf16.mxu0 0
  %1083 = vmatpush1.bf16.msra.mxu0 0
  %1084 = vmatprep.subr.bf16.mxu0 0
  %1085 = vmatpush1.bf16.msra.mxu0 0
  %1086 = vmatprep.mubr.bf16.mxu0 0
  %1087 = vmatmul.mubr.bf16.gmra.mrb[0].mxu0 %v1053
  %v1088 = vpop.f32.mrb[0].mxu0
  %v1089 = vadd.f32 0.0, %v1088
  %v1090 = vpop.f32.mrb[0].mxu0
  %v1091 = vadd.f32 0.0, %v1090
  %v1092 = vpop.f32.mrb[0].mxu0
  %v1093 = vpop.f32.mrb[0].mxu0
  %1094 = vdwg.mxu0
  %1095 = vmatprep.subr.bf16.mxu0 %v167
  %1096 = vmatpush1.bf16.msra.mxu0 %v166
  %1097 = vmatprep.subr.bf16.mxu0 %v171
  %1098 = vmatpush1.bf16.msra.mxu0 %v170
  %1099 = vmatprep.subr.bf16.mxu0 %v175
  %1100 = vmatpush1.bf16.msra.mxu0 %v174
  %1101 = vmatprep.subr.bf16.mxu0 %v179
  %1102 = vmatpush1.bf16.msra.mxu0 %v178
  %1103 = vmatprep.subr.bf16.mxu0 %v183
  %1104 = vmatpush1.bf16.msra.mxu0 %v182
  %1105 = vmatprep.subr.bf16.mxu0 %v187
  %1106 = vmatpush1.bf16.msra.mxu0 %v186
  %1107 = vmatprep.subr.bf16.mxu0 %v191
  %1108 = vmatpush1.bf16.msra.mxu0 %v190
  %1109 = vmatprep.subr.bf16.mxu0 %v195
  %1110 = vmatpush1.bf16.msra.mxu0 %v194
  %1111 = vmatprep.subr.bf16.mxu0 0
  %1112 = vmatpush1.bf16.msra.mxu0 0
  %1113 = vmatprep.subr.bf16.mxu0 0
  %1114 = vmatpush1.bf16.msra.mxu0 0
  %1115 = vmatprep.subr.bf16.mxu0 0
  %1116 = vmatpush1.bf16.msra.mxu0 0
  %1117 = vmatprep.subr.bf16.mxu0 0
  %1118 = vmatpush1.bf16.msra.mxu0 0
  %1119 = vmatprep.subr.bf16.mxu0 0
  %1120 = vmatpush1.bf16.msra.mxu0 0
  %1121 = vmatprep.subr.bf16.mxu0 0
  %1122 = vmatpush1.bf16.msra.mxu0 0
  %1123 = vmatprep.subr.bf16.mxu0 0
  %1124 = vmatpush1.bf16.msra.mxu0 0
  %1125 = vmatprep.subr.bf16.mxu0 0
  %1126 = vmatpush1.bf16.msra.mxu0 0
  %1127 = vmatprep.mubr.bf16.mxu0 0
  %1128 = vmatmul.mubr.bf16.gmra.mrb[0].mxu0 %v1053
  %v1129 = vpop.f32.mrb[0].mxu0
  %v1130 = vadd.f32 0.0, %v1129
  %v1131 = vpop.f32.mrb[0].mxu0
  %v1132 = vadd.f32 0.0, %v1131
  %v1133 = vpop.f32.mrb[0].mxu0
  %v1134 = vpop.f32.mrb[0].mxu0
  %1135 = vdwg.mxu0
  %v1136 = vadd.f32 %v1049, %v1089
  %v1137 = vadd.f32 %v1050, %v1091
  %v1138 = vadd.f32 %v1051, %v1130
  %v1139 = vadd.f32 %v1052, %v1132
  %v1140 = vxor.u32 %v1136, 2147483648
  %v1141 = vmul.f32 %v1140, 1.442695
  %v1142 = vpow.pop %v1141
  %v1143 = vadd.f32 %v1142, 1.0
  %v1144 = vrcp.pop %v1143
  %v1145 = vmul.f32 1.0, %v1144
  %v1146 = vxor.u32 %v1137, 2147483648
  %v1147 = vmul.f32 %v1146, 1.442695
  %v1148 = vpow.pop %v1147
  %v1149 = vadd.f32 %v1148, 1.0
  %v1150 = vrcp.pop %v1149
  %v1151 = vmul.f32 1.0, %v1150
  %v1152 = vtanh.pop %v1138
  %v1153 = vxor.u32 %v1139, 2147483648
  %v1154 = vmul.f32 %v1153, 1.442695
  %v1155 = vpow.pop %v1154
  %v1156 = vadd.f32 %v1155, 1.0
  %v1157 = vrcp.pop %v1156
  %v1158 = vmul.f32 1.0, %v1157
  %v1159 = vmul.f32 %v1151, %v1043
  %v1160 = vmul.f32 %v1145, %v1152
  %v1161 = vadd.f32 %v1159, %v1160
  %v1162 = vtanh.pop %v1161
  %v1163 = vmul.f32 %v1158, %v1162
  %1164 = vst [vmem:[#allocation2] sm:$0xff] %v1163
  %1165 = vst [vmem:[#allocation3] sm:$0xff] %v1161
  // Predicated region
  $region26: #{seq2seq_forward.1} parent=0 // pred_check
    %p1166 = pneg %p21
  $region27: #{seq2seq_forward.1} parent=0 // pred_check_branch
    %1168 = sbr.rel (%p1166) target = $region29
  $region28: #{seq2seq_forward.1} parent=0 // pred_region
    %v1169 = vld [vmem:[%s1] sm:$0xff]
    %v1170 = vld [vmem:[%s1 + $0x8] sm:$0xff]
    %v1171 = vld [vmem:[%s3] sm:$0xff]
    %v1172 = vld [vmem:[%s3 + $0x8] sm:$0xff]
    %v1173 = vld [vmem:[%s3 + $0x10] sm:$0xff]
    %v1174 = vld [vmem:[%s3 + $0x18] sm:$0xff]
    %v1175 = vld [vmem:[%s3 + $0x20] sm:$0xff]
    %v1176 = vld [vmem:[%s3 + $0x28] sm:$0xff]
    %v1177 = vld [vmem:[%s3 + $0x30] sm:$0xff]
    %v1178 = vld [vmem:[%s3 + $0x38] sm:$0xff]
    %v1179 = vld [vmem:[%s3 + $0x40] sm:$0xff]
    %v1180 = vld [vmem:[%s3 + $0x48] sm:$0xff]
    %v1181 = vld [vmem:[%s3 + $0x50] sm:$0xff]
    %v1182 = vld [vmem:[%s3 + $0x58] sm:$0xff]
    %v1183 = vld [vmem:[%s3 + $0x60] sm:$0xff]
    %v1184 = vld [vmem:[%s3 + $0x68] sm:$0xff]
    %v1185 = vld [vmem:[%s3 + $0x70] sm:$0xff]
    %v1186 = vld [vmem:[%s3 + $0x78] sm:$0xff]
    %v1187 = vld [vmem:[%s3 + $0x80] sm:$0xff]
    %v1188 = vld [vmem:[%s3 + $0x88] sm:$0xff]
    %v1189 = vld [vmem:[%s3 + $0x90] sm:$0xff]
    %v1190 = vld [vmem:[%s3 + $0x98] sm:$0xff]
    %v1191 = vld [vmem:[%s3 + $0xa0] sm:$0xff]
    %v1192 = vld [vmem:[%s3 + $0xa8] sm:$0xff]
    %v1193 = vld [vmem:[%s3 + $0xb0] sm:$0xff]
    %v1194 = vld [vmem:[%s3 + $0xb8] sm:$0xff]
    %v1195 = vld [vmem:[%s3 + $0xc0] sm:$0xff]
    %v1196 = vld [vmem:[%s3 + $0xc8] sm:$0xff]
    %v1197 = vld [vmem:[%s3 + $0xd0] sm:$0xff]
    %v1198 = vld [vmem:[%s3 + $0xd8] sm:$0xff]
    %v1199 = vld [vmem:[%s3 + $0xe0] sm:$0xff]
    %v1200 = vld [vmem:[%s3 + $0xe8] sm:$0xff]
    %v1201 = vld [vmem:[%s3 + $0xf0] sm:$0xff]
    %v1202 = vld [vmem:[%s3 + $0xf8] sm:$0xff]
    %v1203 = vunpack.c.l.bf16 %v1169
    %v1204 = vunpack.c.h.bf16 %v1169
    %v1205 = vunpack.c.l.bf16 %v1170
    %v1206 = vunpack.c.h.bf16 %v1170
    %v1207 = vpack.c.bf16 %v1163, %v1163
    %v1240 = vunpack.c.l.b16 %v1171
    %v1241 = vunpack.c.h.b16 %v1171
    %v1242 = vunpack.c.l.b16 %v1172
    %v1243 = vunpack.c.h.b16 %v1172
    %v1244 = vunpack.c.l.b16 %v1173
    %v1245 = vunpack.c.h.b16 %v1173
    %v1246 = vunpack.c.l.b16 %v1174
    %v1247 = vunpack.c.h.b16 %v1174
    %v1248 = vunpack.c.l.b16 %v1175
    %v1249 = vunpack.c.h.b16 %v1175
    %v1250 = vunpack.c.l.b16 %v1176
    %v1251 = vunpack.c.h.b16 %v1176
    %v1252 = vunpack.c.l.b16 %v1177
    %v1253 = vunpack.c.h.b16 %v1177
    %v1254 = vunpack.c.l.b16 %v1178
    %v1255 = vunpack.c.h.b16 %v1178
    %v1256 = vunpack.c.l.b16 %v1179
    %v1257 = vunpack.c.h.b16 %v1179
    %v1258 = vunpack.c.l.b16 %v1180
    %v1259 = vunpack.c.h.b16 %v1180
    %v1260 = vunpack.c.l.b16 %v1181
    %v1261 = vunpack.c.h.b16 %v1181
    %v1262 = vunpack.c.l.b16 %v1182
    %v1263 = vunpack.c.h.b16 %v1182
    %v1264 = vunpack.c.l.b16 %v1183
    %v1265 = vunpack.c.h.b16 %v1183
    %v1266 = vunpack.c.l.b16 %v1184
    %v1267 = vunpack.c.h.b16 %v1184
    %v1268 = vunpack.c.l.b16 %v1185
    %v1269 = vunpack.c.h.b16 %v1185
    %v1270 = vunpack.c.l.b16 %v1186
    %v1271 = vunpack.c.h.b16 %v1186
    %v1272 = vunpack.c.l.b16 %v1187
    %v1273 = vunpack.c.h.b16 %v1187
    %v1274 = vunpack.c.l.b16 %v1188
    %v1275 = vunpack.c.h.b16 %v1188
    %v1276 = vunpack.c.l.b16 %v1189
    %v1277 = vunpack.c.h.b16 %v1189
    %v1278 = vunpack.c.l.b16 %v1190
    %v1279 = vunpack.c.h.b16 %v1190
    %v1280 = vunpack.c.l.b16 %v1191
    %v1281 = vunpack.c.h.b16 %v1191
    %v1282 = vunpack.c.l.b16 %v1192
    %v1283 = vunpack.c.h.b16 %v1192
    %v1284 = vunpack.c.l.b16 %v1193
    %v1285 = vunpack.c.h.b16 %v1193
    %v1286 = vunpack.c.l.b16 %v1194
    %v1287 = vunpack.c.h.b16 %v1194
    %v1288 = vunpack.c.l.b16 %v1195
    %v1289 = vunpack.c.h.b16 %v1195
    %v1290 = vunpack.c.l.b16 %v1196
    %v1291 = vunpack.c.h.b16 %v1196
    %v1292 = vunpack.c.l.b16 %v1197
    %v1293 = vunpack.c.h.b16 %v1197
    %v1294 = vunpack.c.l.b16 %v1198
    %v1295 = vunpack.c.h.b16 %v1198
    %v1296 = vunpack.c.l.b16 %v1199
    %v1297 = vunpack.c.h.b16 %v1199
    %v1298 = vunpack.c.l.b16 %v1200
    %v1299 = vunpack.c.h.b16 %v1200
    %v1300 = vunpack.c.l.b16 %v1201
    %v1301 = vunpack.c.h.b16 %v1201
    %v1302 = vunpack.c.l.b16 %v1202
    %v1303 = vunpack.c.h.b16 %v1202
    %v1304 = vpack.c.b16 %v1244, %v1240
    %v1305 = vpack.c.b16 %v1245, %v1241
    %v1306 = vpack.c.b16 %v1246, %v1242
    %v1307 = vpack.c.b16 %v1247, %v1243
    %v1308 = vpack.c.b16 %v1252, %v1248
    %v1309 = vpack.c.b16 %v1253, %v1249
    %v1310 = vpack.c.b16 %v1254, %v1250
    %v1311 = vpack.c.b16 %v1255, %v1251
    %v1312 = vpack.c.b16 %v1260, %v1256
    %v1313 = vpack.c.b16 %v1261, %v1257
    %v1314 = vpack.c.b16 %v1262, %v1258
    %v1315 = vpack.c.b16 %v1263, %v1259
    %v1316 = vpack.c.b16 %v1268, %v1264
    %v1317 = vpack.c.b16 %v1269, %v1265
    %v1318 = vpack.c.b16 %v1270, %v1266
    %v1319 = vpack.c.b16 %v1271, %v1267
    %v1320 = vpack.c.b16 %v1276, %v1272
    %v1321 = vpack.c.b16 %v1277, %v1273
    %v1322 = vpack.c.b16 %v1278, %v1274
    %v1323 = vpack.c.b16 %v1279, %v1275
    %v1324 = vpack.c.b16 %v1284, %v1280
    %v1325 = vpack.c.b16 %v1285, %v1281
    %v1326 = vpack.c.b16 %v1286, %v1282
    %v1327 = vpack.c.b16 %v1287, %v1283
    %v1328 = vpack.c.b16 %v1292, %v1288
    %v1329 = vpack.c.b16 %v1293, %v1289
    %v1330 = vpack.c.b16 %v1294, %v1290
    %v1331 = vpack.c.b16 %v1295, %v1291
    %v1332 = vpack.c.b16 %v1300, %v1296
    %v1333 = vpack.c.b16 %v1301, %v1297
    %v1334 = vpack.c.b16 %v1302, %v1298
    %v1335 = vpack.c.b16 %v1303, %v1299
    %1368 = vmatprep.subr.bf16.mxu0 %v1305
    %1369 = vmatpush1.bf16.msra.mxu0 %v1304
    %1370 = vmatprep.subr.bf16.mxu0 %v1309
    %1371 = vmatpush1.bf16.msra.mxu0 %v1308
    %1372 = vmatprep.subr.bf16.mxu0 %v1313
    %1373 = vmatpush1.bf16.msra.mxu0 %v1312
    %1374 = vmatprep.subr.bf16.mxu0 %v1317
    %1375 = vmatpush1.bf16.msra.mxu0 %v1316
    %1376 = vmatprep.subr.bf16.mxu0 %v1321
    %1377 = vmatpush1.bf16.msra.mxu0 %v1320
    %1378 = vmatprep.subr.bf16.mxu0 %v1325
    %1379 = vmatpush1.bf16.msra.mxu0 %v1324
    %1380 = vmatprep.subr.bf16.mxu0 %v1329
    %1381 = vmatpush1.bf16.msra.mxu0 %v1328
    %1382 = vmatprep.subr.bf16.mxu0 %v1333
    %1383 = vmatpush1.bf16.msra.mxu0 %v1332
    %1384 = vmatprep.subr.bf16.mxu0 0
    %1385 = vmatpush1.bf16.msra.mxu0 0
    %1386 = vmatprep.subr.bf16.mxu0 0
    %1387 = vmatpush1.bf16.msra.mxu0 0
    %1388 = vmatprep.subr.bf16.mxu0 0
    %1389 = vmatpush1.bf16.msra.mxu0 0
    %1390 = vmatprep.subr.bf16.mxu0 0
    %1391 = vmatpush1.bf16.msra.mxu0 0
    %1392 = vmatprep.subr.bf16.mxu0 0
    %1393 = vmatpush1.bf16.msra.mxu0 0
    %1394 = vmatprep.subr.bf16.mxu0 0
    %1395 = vmatpush1.bf16.msra.mxu0 0
    %1396 = vmatprep.subr.bf16.mxu0 0
    %1397 = vmatpush1.bf16.msra.mxu0 0
    %1398 = vmatprep.subr.bf16.mxu0 0
    %1399 = vmatpush1.bf16.msra.mxu0 0
    %1400 = vmatprep.mubr.bf16.mxu0 0
    %1401 = vmatmul.mubr.bf16.gmra.mrb[0].mxu0 %v1207
    %v1402 = vpop.f32.mrb[0].mxu0
    %v1403 = vadd.f32 0.0, %v1402
    %v1404 = vpop.f32.mrb[0].mxu0
    %v1405 = vadd.f32 0.0, %v1404
    %v1406 = vpop.f32.mrb[0].mxu0
    %v1407 = vpop.f32.mrb[0].mxu0
    %1408 = vdwg.mxu0
    %1409 = vmatprep.subr.bf16.mxu0 %v1307
    %1410 = vmatpush1.bf16.msra.mxu0 %v1306
    %1411 = vmatprep.subr.bf16.mxu0 %v1311
    %1412 = vmatpush1.bf16.msra.mxu0 %v1310
    %1413 = vmatprep.subr.bf16.mxu0 %v1315
    %1414 = vmatpush1.bf16.msra.mxu0 %v1314
    %1415 = vmatprep.subr.bf16.mxu0 %v1319
    %1416 = vmatpush1.bf16.msra.mxu0 %v1318
    %1417 = vmatprep.subr.bf16.mxu0 %v1323
    %1418 = vmatpush1.bf16.msra.mxu0 %v1322
    %1419 = vmatprep.subr.bf16.mxu0 %v1327
    %1420 = vmatpush1.bf16.msra.mxu0 %v1326
    %1421 = vmatprep.subr.bf16.mxu0 %v1331
    %1422 = vmatpush1.bf16.msra.mxu0 %v1330
    %1423 = vmatprep.subr.bf16.mxu0 %v1335
    %1424 = vmatpush1.bf16.msra.mxu0 %v1334
    %1425 = vmatprep.subr.bf16.mxu0 0
    %1426 = vmatpush1.bf16.msra.mxu0 0
    %1427 = vmatprep.subr.bf16.mxu0 0
    %1428 = vmatpush1.bf16.msra.mxu0 0
    %1429 = vmatprep.subr.bf16.mxu0 0
    %1430 = vmatpush1.bf16.msra.mxu0 0
    %1431 = vmatprep.subr.bf16.mxu0 0
    %1432 = vmatpush1.bf16.msra.mxu0 0
    %1433 = vmatprep.subr.bf16.mxu0 0
    %1434 = vmatpush1.bf16.msra.mxu0 0
    %1435 = vmatprep.subr.bf16.mxu0 0
    %1436 = vmatpush1.bf16.msra.mxu0 0
    %1437 = vmatprep.subr.bf16.mxu0 0
    %1438 = vmatpush1.bf16.msra.mxu0 0
    %1439 = vmatprep.subr.bf16.mxu0 0
    %1440 = vmatpush1.bf16.msra.mxu0 0
    %1441 = vmatprep.mubr.bf16.mxu0 0
    %1442 = vmatmul.mubr.bf16.gmra.mrb[0].mxu0 %v1207
    %v1443 = vpop.f32.mrb[0].mxu0
    %v1444 = vadd.f32 0.0, %v1443
    %v1445 = vpop.f32.mrb[0].mxu0
    %v1446 = vadd.f32 0.0, %v1445
    %v1447 = vpop.f32.mrb[0].mxu0
    %v1448 = vpop.f32.mrb[0].mxu0
    %1449 = vdwg.mxu0
    %v1450 = vadd.f32 %v1203, %v1403
    %v1451 = vadd.f32 %v1204, %v1405
    %v1452 = vadd.f32 %v1205, %v1444
    %v1453 = vadd.f32 %v1206, %v1446
    %v1454 = vxor.u32 %v1450, 2147483648
    %v1455 = vmul.f32 %v1454, 1.442695
    %v1456 = vpow.pop %v1455
    %v1457 = vadd.f32 %v1456, 1.0
    %v1458 = vrcp.pop %v1457
    %v1459 = vmul.f32 1.0, %v1458
    %v1460 = vxor.u32 %v1451, 2147483648
    %v1461 = vmul.f32 %v1460, 1.442695
    %v1462 = vpow.pop %v1461
    %v1463 = vadd.f32 %v1462, 1.0
    %v1464 = vrcp.pop %v1463
    %v1465 = vmul.f32 1.0, %v1464
    %v1466 = vtanh.pop %v1452
    %v1467 = vxor.u32 %v1453, 2147483648
    %v1468 = vmul.f32 %v1467, 1.442695
    %v1469 = vpow.pop %v1468
    %v1470 = vadd.f32 %v1469, 1.0
    %v1471 = vrcp.pop %v1470
    %v1472 = vmul.f32 1.0, %v1471
    %v1473 = vmul.f32 %v1465, %v1161
    %v1474 = vmul.f32 %v1459, %v1466
    %v1475 = vadd.f32 %v1473, %v1474
    %v1476 = vtanh.pop %v1475
    %v1477 = vmul.f32 %v1472, %v1476
    %v1478 = vld [vmem:[%s4] sm:$0x1]
    %v1480 = vlaneseq
    %v1481 = vshrl.u32 %v1480, 7
    %v1482 = vsub.s32 0, %v1481
    %v1483 = vrot.slane %v1478, %v1482
    %v1485 = vmul.f32 %v1477, %v1483
    %1486 = vadd.xlane.f32.xlu0 %v1485
    %v1487 = vpop.xlane.xlu0 %1486
    %vm1488 = vcmask 7168
    %1489 = vst.msk [vmem:[%s5] sm:$0xff] %vm1488, %v1487
  $region29: #{seq2seq_forward.1} parent=0 // pred_fallthru
    _
  // Predicated region
  $region30: #{seq2seq_forward.1} parent=0 // pred_check
    _
  $region31: #{seq2seq_forward.1} parent=0 // pred_check_branch
    %1491 = sbr.rel (0) target = $region33
  $region32: #{seq2seq_forward.1} parent=0 // pred_region
    _
  $region33: #{seq2seq_forward.1} parent=0 // pred_fallthru
    _
  // Predicated region
  $region34: #{seq2seq_forward.1} parent=0 // pred_check
    _
  $region35: #{seq2seq_forward.1} parent=0 // pred_check_branch
    %1493 = sbr.rel (0) target = $region37
  $region36: #{seq2seq_forward.1} parent=0 // pred_region
    _
  $region37: #{seq2seq_forward.1} parent=0 // pred_fallthru
    _

</llo_original>
